<compile_context>
chip_gen: v7x
topology: tpu7x:2x2x1
jax: 0.10.0
libtpu: 0.0.40
codegen_flags: <defaults>
</compile_context>

<pallas_src>
import functools

import jax
import jax.numpy as jnp
from jax.experimental import pallas as pl
from jax.experimental.pallas import tpu as pltpu


LANE = 128
SUBLANE_BF16 = 16


def _round_up(n, m):
    return ((n + m - 1) // m) * m


def _rn_kernel(activation_flags, q_ref, w0_ref, wrest_ref, b_ref, out_ref):
    """Fused g-MLP + f-MLP over one (TB, K0) row block.

    q_ref     : bf16 (TB, K0)      activation block for this grid step
    w0_ref    : bf16 (K0, W)       first Linear weight (K left narrow)
    wrest_ref : bf16 (L-1, W, W)   stacked remaining Linear weights
    b_ref     : f32  (L, 1, W)     stacked biases
    out_ref   : bf16 (TB, W)       lane-dense output block (unmasked stores)
    """
    n_layers = len(activation_flags)
    x = q_ref[...]                                        # bf16 (TB, K0)
    for i in range(n_layers):
        w = w0_ref[...] if i == 0 else wrest_ref[i - 1]   # bf16 (K, W)
        acc = jnp.dot(x, w, preferred_element_type=jnp.float32) + b_ref[i]
        if activation_flags[i]:
            acc = jnp.maximum(acc, 0.0)                   # VPU filler
        x = acc.astype(jnp.bfloat16) if i < n_layers - 1 else acc
    out_ref[...] = x.astype(out_ref.dtype)


def pack_params(params):
    """Pack per-layer (w, b) into three arrays the kernel keeps VMEM-resident.

    Hidden/output dims are zero-padded to a uniform W = round_up(max dim, 128)
    so layers 1..L-1 stack into one (L-1, W, W) array.  Zero pad rows/cols and
    zero bias lanes keep padded lanes exactly 0 through every ReLU, so they
    never contaminate real lanes; padded batch rows are sliced off outside.
    The first layer's K stays narrow (only 16-aligned for bf16 packing) so the
    q DMA does not move 128-lane zero padding.
    """
    weights = params[0::2]
    biases = params[1::2]
    n_layers = len(weights)
    assert n_layers >= 2, "RelationNetwork always has >= 2 Linear layers (g+f)"

    k0 = weights[0].shape[0]
    k0_pad = _round_up(k0, SUBLANE_BF16)
    w_dim = _round_up(max(w.shape[1] for w in weights), LANE)

    w0 = jnp.zeros((k0_pad, w_dim), jnp.bfloat16)
    w0 = w0.at[:k0, :weights[0].shape[1]].set(weights[0].astype(jnp.bfloat16))

    wrest = jnp.zeros((n_layers - 1, w_dim, w_dim), jnp.bfloat16)
    for i in range(1, n_layers):
        k, n = weights[i].shape
        wrest = wrest.at[i - 1, :k, :n].set(weights[i].astype(jnp.bfloat16))

    b = jnp.zeros((n_layers, 1, w_dim), jnp.float32)
    for i in range(n_layers):
        n = biases[i].shape[-1]
        b = b.at[i, :, :n].set(biases[i].reshape(1, n).astype(jnp.float32))

    return w0, wrest, b


def _pick_tb(batch, *, min_tb=256, max_tb=2048):
    """Largest row tile <= max_tb that still yields >= 2 grid steps when the
    batch allows it (v7x: 2 TensorCores only help with >= 2 'parallel' steps).
    """
    half = _round_up(pl.cdiv(batch, 2), min_tb)
    return int(max(min_tb, min(max_tb, half)))


def relation_network_forward(q, packed_params, activation_flags, out_dim):
    """q: (batch, query_dim) f32/bf16.  packed_params: output of pack_params."""
    w0, wrest, b = packed_params
    batch, in_dim = q.shape
    k0_pad, w_dim = w0.shape
    n_layers = len(activation_flags)

    tb = _pick_tb(batch)
    batch_pad = _round_up(batch, tb)

    q_p = q.astype(jnp.bfloat16)
    if batch_pad != batch or k0_pad != in_dim:
        q_p = jnp.pad(q_p, ((0, batch_pad - batch), (0, k0_pad - in_dim)))

    grid = (batch_pad // tb,)

    in_specs = [
        # Activations: pipelined over the batch grid axis, narrow (K0) lanes.
        pl.BlockSpec((tb, k0_pad), lambda i: (i, 0)),
        # Params: constant block index -> fetched once, stay VMEM-resident.
        pl.BlockSpec((k0_pad, w_dim), lambda i: (0, 0)),
        pl.BlockSpec((n_layers - 1, w_dim, w_dim), lambda i: (0, 0, 0)),
        pl.BlockSpec((n_layers, 1, w_dim), lambda i: (0, 0, 0)),
    ]
    out_specs = pl.BlockSpec((tb, w_dim), lambda i: (i, 0))

    flops = 2 * batch_pad * (k0_pad * w_dim + (n_layers - 1) * w_dim * w_dim)
    bytes_accessed = (
        int(batch_pad * k0_pad * 2) +        # q   (bf16, narrow lanes)
        int(batch_pad * w_dim * 2) +         # out (bf16, 128-lane dense)
        int(w0.size * 2 + wrest.size * 2 + b.size * 4))

    kernel = functools.partial(
        _rn_kernel, tuple(bool(f) for f in activation_flags))

    out_p = pl.pallas_call(
        kernel,
        out_shape=jax.ShapeDtypeStruct((batch_pad, w_dim), jnp.bfloat16),
        grid=grid,
        in_specs=in_specs,
        out_specs=out_specs,
        compiler_params=pltpu.CompilerParams(
            dimension_semantics=("parallel",),          # v7x: shard over 2 TCs
            vmem_limit_bytes=32 * 1024 * 1024),         # tiny footprint; safe
        cost_estimate=pl.CostEstimate(
            flops=int(flops), transcendentals=0,
            bytes_accessed=int(bytes_accessed)),
    )(q_p, w0, wrest, b)

    return out_p[:batch, :out_dim]


def init_mlp_params(key, input_dim, hidden_dims, output_dim):
    """PyTorch-Linear-style uniform init.  Returns (params, flags, key)."""
    dims = [input_dim] + list(hidden_dims) + [output_dim]
    params = []
    flags = []
    for i in range(len(dims) - 1):
        key, wk, bk = jax.random.split(key, 3)
        fan_in = dims[i]
        scale = 1.0 / jnp.sqrt(jnp.float32(fan_in))
        w = jax.random.uniform(
            wk, (dims[i], dims[i + 1]), jnp.float32, -scale, scale)
        b = jax.random.uniform(
            bk, (1, dims[i + 1]), jnp.float32, -scale, scale)
        params += [w, b]
        # nonlinear=True: ReLU after every hidden layer, not after the output.
        flags.append(i < len(dims) - 2)
    return params, flags, key


if __name__ == "__main__":
    # RelationNetwork normally runs over O(n_obj^2) pairs flattened into the
    # batch axis; batch=512 with adaptive tb=256 exercises a 2-step grid.
    batch_size = 512
    query_dim = 32            # == input_dim_g
    hidden_dims_g = [64, 64]
    output_dim_g = 64         # == input_dim_f
    hidden_dims_f = [64]
    output_dim_f = 32

    key = jax.random.PRNGKey(0)
    g_params, g_flags, key = init_mlp_params(
        key, query_dim, hidden_dims_g, output_dim_g)
    f_params, f_flags, key = init_mlp_params(
        key, output_dim_g, hidden_dims_f, output_dim_f)

    params = g_params + f_params
    activation_flags = g_flags + f_flags
    packed = pack_params(params)

    key, qk = jax.random.split(key)
    q = jax.random.normal(qk, (batch_size, query_dim), jnp.float32)

    out = relation_network_forward(q, packed, activation_flags, output_dim_f)
    out = jax.block_until_ready(out)

    assert out.shape == (batch_size, output_dim_f), out.shape
    assert out.dtype == jnp.bfloat16, out.dtype
    assert jnp.all(jnp.isfinite(out.astype(jnp.float32)))

    # Pure-JAX reference replicating the kernel arithmetic (bf16 inputs /
    # weights / inter-layer activations, f32 accumulation, bf16 output).
    x = q.astype(jnp.bfloat16)
    n_layers = len(params) // 2
    for i in range(n_layers):
        w = params[2 * i].astype(jnp.bfloat16)
        bb = params[2 * i + 1].astype(jnp.float32)
        y = jnp.dot(x, w, preferred_element_type=jnp.float32) + bb
        if activation_flags[i]:
            y = jnp.maximum(y, 0.0)
        x = y.astype(jnp.bfloat16) if i < n_layers - 1 else y
    ref = x.astype(jnp.bfloat16)

    err = float(jnp.max(jnp.abs(out.astype(jnp.float32) -
                                ref.astype(jnp.float32))))
    assert err < 5e-2, err

    print("KERNEL_OK")
</pallas_src>

<mosaic_0001>
module attributes {stable_mosaic.version = 11 : i64} {
  func.func @_rn_kernel(%arg0: i32, %arg1: memref<256x32xbf16, #tpu.memory_space<vmem>>, %arg2: memref<32x128xbf16, #tpu.memory_space<vmem>>, %arg3: memref<4x128x128xbf16, #tpu.memory_space<vmem>>, %arg4: memref<5x1x128xf32, #tpu.memory_space<vmem>>, %arg5: memref<256x128xbf16, #tpu.memory_space<vmem>>) attributes {dimension_semantics = [#tpu.dimension_semantics<parallel>], iteration_bounds = array<i64: 2>, scalar_prefetch = 0 : i64, scratch_operands = 0 : i64, tpu.core_type = #tpu.core_type<tc>, window_params = [{transform_indices = @transform_0, window_bounds = array<i64: 256, 32>}, {pipeline_mode = #tpu.pipeline_mode<synchronous>, transform_indices = @transform_1, window_bounds = array<i64: 32, 128>}, {pipeline_mode = #tpu.pipeline_mode<synchronous>, transform_indices = @transform_2, window_bounds = array<i64: 4, 128, 128>}, {pipeline_mode = #tpu.pipeline_mode<synchronous>, transform_indices = @transform_3, window_bounds = array<i64: 5, 1, 128>}, {transform_indices = @transform_4, window_bounds = array<i64: 256, 128>}]} {
    %c0 = arith.constant 0 : index
    %c0_0 = arith.constant 0 : index
    %0 = vector.load %arg1[%c0, %c0_0] : memref<256x32xbf16, #tpu.memory_space<vmem>>, vector<256x32xbf16>
    %c0_1 = arith.constant 0 : index
    %c0_2 = arith.constant 0 : index
    %1 = vector.load %arg2[%c0_1, %c0_2] : memref<32x128xbf16, #tpu.memory_space<vmem>>, vector<32x128xbf16>
    %cst = arith.constant dense<0.000000e+00> : vector<256x128xf32>
    %2 = tpu.matmul %0, %1, %cst {dimension_numbers = #tpu.dot_dimension_numbers<[1], [0], [0], [1], [0, 0, 1, 1], [], []>} : vector<256x32xbf16>, vector<32x128xbf16>, vector<256x128xf32> -> vector<256x128xf32>
    %c0_3 = arith.constant 0 : index
    %c0_4 = arith.constant 0 : index
    %c0_5 = arith.constant 0 : index
    %3 = vector.load %arg4[%c0_3, %c0_4, %c0_5] : memref<5x1x128xf32, #tpu.memory_space<vmem>>, vector<1x1x128xf32>
    %4 = vector.shape_cast %3 : vector<1x1x128xf32> to vector<1x128xf32>
    %5 = vector.broadcast %4 : vector<1x128xf32> to vector<256x128xf32>
    %6 = arith.addf %2, %5 : vector<256x128xf32>
    %cst_6 = arith.constant 0.000000e+00 : f32
    %7 = vector.broadcast %cst_6 : f32 to vector<256x128xf32>
    %8 = arith.maximumf %6, %7 : vector<256x128xf32>
    %9 = arith.truncf %8 : vector<256x128xf32> to vector<256x128xbf16>
    %c0_7 = arith.constant 0 : index
    %c0_8 = arith.constant 0 : index
    %c0_9 = arith.constant 0 : index
    %10 = vector.load %arg3[%c0_7, %c0_8, %c0_9] : memref<4x128x128xbf16, #tpu.memory_space<vmem>>, vector<1x128x128xbf16>
    %11 = vector.shape_cast %10 : vector<1x128x128xbf16> to vector<128x128xbf16>
    %cst_10 = arith.constant dense<0.000000e+00> : vector<256x128xf32>
    %12 = tpu.matmul %9, %11, %cst_10 {dimension_numbers = #tpu.dot_dimension_numbers<[1], [0], [0], [1], [0, 0, 1, 1], [], []>} : vector<256x128xbf16>, vector<128x128xbf16>, vector<256x128xf32> -> vector<256x128xf32>
    %c1 = arith.constant 1 : index
    %c0_11 = arith.constant 0 : index
    %c0_12 = arith.constant 0 : index
    %13 = vector.load %arg4[%c1, %c0_11, %c0_12] : memref<5x1x128xf32, #tpu.memory_space<vmem>>, vector<1x1x128xf32>
    %14 = vector.shape_cast %13 : vector<1x1x128xf32> to vector<1x128xf32>
    %15 = vector.broadcast %14 : vector<1x128xf32> to vector<256x128xf32>
    %16 = arith.addf %12, %15 : vector<256x128xf32>
    %cst_13 = arith.constant 0.000000e+00 : f32
    %17 = vector.broadcast %cst_13 : f32 to vector<256x128xf32>
    %18 = arith.maximumf %16, %17 : vector<256x128xf32>
    %19 = arith.truncf %18 : vector<256x128xf32> to vector<256x128xbf16>
    %c1_14 = arith.constant 1 : index
    %c0_15 = arith.constant 0 : index
    %c0_16 = arith.constant 0 : index
    %20 = vector.load %arg3[%c1_14, %c0_15, %c0_16] : memref<4x128x128xbf16, #tpu.memory_space<vmem>>, vector<1x128x128xbf16>
    %21 = vector.shape_cast %20 : vector<1x128x128xbf16> to vector<128x128xbf16>
    %cst_17 = arith.constant dense<0.000000e+00> : vector<256x128xf32>
    %22 = tpu.matmul %19, %21, %cst_17 {dimension_numbers = #tpu.dot_dimension_numbers<[1], [0], [0], [1], [0, 0, 1, 1], [], []>} : vector<256x128xbf16>, vector<128x128xbf16>, vector<256x128xf32> -> vector<256x128xf32>
    %c2 = arith.constant 2 : index
    %c0_18 = arith.constant 0 : index
    %c0_19 = arith.constant 0 : index
    %23 = vector.load %arg4[%c2, %c0_18, %c0_19] : memref<5x1x128xf32, #tpu.memory_space<vmem>>, vector<1x1x128xf32>
    %24 = vector.shape_cast %23 : vector<1x1x128xf32> to vector<1x128xf32>
    %25 = vector.broadcast %24 : vector<1x128xf32> to vector<256x128xf32>
    %26 = arith.addf %22, %25 : vector<256x128xf32>
    %27 = arith.truncf %26 : vector<256x128xf32> to vector<256x128xbf16>
    %c2_20 = arith.constant 2 : index
    %c0_21 = arith.constant 0 : index
    %c0_22 = arith.constant 0 : index
    %28 = vector.load %arg3[%c2_20, %c0_21, %c0_22] : memref<4x128x128xbf16, #tpu.memory_space<vmem>>, vector<1x128x128xbf16>
    %29 = vector.shape_cast %28 : vector<1x128x128xbf16> to vector<128x128xbf16>
    %cst_23 = arith.constant dense<0.000000e+00> : vector<256x128xf32>
    %30 = tpu.matmul %27, %29, %cst_23 {dimension_numbers = #tpu.dot_dimension_numbers<[1], [0], [0], [1], [0, 0, 1, 1], [], []>} : vector<256x128xbf16>, vector<128x128xbf16>, vector<256x128xf32> -> vector<256x128xf32>
    %c3 = arith.constant 3 : index
    %c0_24 = arith.constant 0 : index
    %c0_25 = arith.constant 0 : index
    %31 = vector.load %arg4[%c3, %c0_24, %c0_25] : memref<5x1x128xf32, #tpu.memory_space<vmem>>, vector<1x1x128xf32>
    %32 = vector.shape_cast %31 : vector<1x1x128xf32> to vector<1x128xf32>
    %33 = vector.broadcast %32 : vector<1x128xf32> to vector<256x128xf32>
    %34 = arith.addf %30, %33 : vector<256x128xf32>
    %cst_26 = arith.constant 0.000000e+00 : f32
    %35 = vector.broadcast %cst_26 : f32 to vector<256x128xf32>
    %36 = arith.maximumf %34, %35 : vector<256x128xf32>
    %37 = arith.truncf %36 : vector<256x128xf32> to vector<256x128xbf16>
    %c3_27 = arith.constant 3 : index
    %c0_28 = arith.constant 0 : index
    %c0_29 = arith.constant 0 : index
    %38 = vector.load %arg3[%c3_27, %c0_28, %c0_29] : memref<4x128x128xbf16, #tpu.memory_space<vmem>>, vector<1x128x128xbf16>
    %39 = vector.shape_cast %38 : vector<1x128x128xbf16> to vector<128x128xbf16>
    %cst_30 = arith.constant dense<0.000000e+00> : vector<256x128xf32>
    %40 = tpu.matmul %37, %39, %cst_30 {dimension_numbers = #tpu.dot_dimension_numbers<[1], [0], [0], [1], [0, 0, 1, 1], [], []>} : vector<256x128xbf16>, vector<128x128xbf16>, vector<256x128xf32> -> vector<256x128xf32>
    %c4 = arith.constant 4 : index
    %c0_31 = arith.constant 0 : index
    %c0_32 = arith.constant 0 : index
    %41 = vector.load %arg4[%c4, %c0_31, %c0_32] : memref<5x1x128xf32, #tpu.memory_space<vmem>>, vector<1x1x128xf32>
    %42 = vector.shape_cast %41 : vector<1x1x128xf32> to vector<1x128xf32>
    %43 = vector.broadcast %42 : vector<1x128xf32> to vector<256x128xf32>
    %44 = arith.addf %40, %43 : vector<256x128xf32>
    %45 = arith.truncf %44 : vector<256x128xf32> to vector<256x128xbf16>
    %c0_33 = arith.constant 0 : index
    %c0_34 = arith.constant 0 : index
    %46 = vector.load %arg5[%c0_33, %c0_34] : memref<256x128xbf16, #tpu.memory_space<vmem>>, vector<256x128xbf16>
    tpu.vector_store %arg5[%c0_33, %c0_34], %45 {strides = array<i32>} : memref<256x128xbf16, #tpu.memory_space<vmem>>, vector<256x128xbf16>,
    return
  }
  func.func @transform_0(%arg0: i32) -> (i32, i32) {
    %c0_i32 = arith.constant 0 : i32
    %c0_i32_0 = arith.constant 0 : i32
    return %arg0, %c0_i32 : i32, i32
  }
  func.func @transform_1(%arg0: i32) -> (i32, i32) {
    %c0_i32 = arith.constant 0 : i32
    %c0_i32_0 = arith.constant 0 : i32
    %c0_i32_1 = arith.constant 0 : i32
    return %c0_i32, %c0_i32_0 : i32, i32
  }
  func.func @transform_2(%arg0: i32) -> (i32, i32, i32) {
    %c0_i32 = arith.constant 0 : i32
    %c0_i32_0 = arith.constant 0 : i32
    %c0_i32_1 = arith.constant 0 : i32
    %c0_i32_2 = arith.constant 0 : i32
    return %c0_i32, %c0_i32_0, %c0_i32_1 : i32, i32, i32
  }
  func.func @transform_3(%arg0: i32) -> (i32, i32, i32) {
    %c0_i32 = arith.constant 0 : i32
    %c0_i32_0 = arith.constant 0 : i32
    %c0_i32_1 = arith.constant 0 : i32
    %c0_i32_2 = arith.constant 0 : i32
    return %c0_i32, %c0_i32_0, %c0_i32_1 : i32, i32, i32
  }
  func.func @transform_4(%arg0: i32) -> (i32, i32) {
    %c0_i32 = arith.constant 0 : i32
    %c0_i32_0 = arith.constant 0 : i32
    return %arg0, %c0_i32 : i32, i32
  }
}

</mosaic_0001>

<llo_original>
// kernel: tpu_custom_call.1
$region0: #{tpu_custom_call.1}
  #allocation0 [shape = 'u32[]', space=smem, size = 0x4, offset = 0x4, fixed_abs, tag = 'smem constant byte address 0x4 - core index']
  #allocation1 [shape = 'u32[144,128]{1,0:T(1,128)}', space=vmem, size = 0x12000, scoped, tag = 'internal scratch']
  %s0 = inlined_call_operand.vmem [shape: bf16[512,32], index: 0, kind: input, shape index: {}]
  %s1 = inlined_call_operand.vmem [shape: bf16[32,128], index: 1, kind: input, shape index: {}]
  %s2 = inlined_call_operand.vmem [shape: bf16[4,128,128], index: 2, kind: input, shape index: {}]
  %s3 = inlined_call_operand.vmem [shape: f32[5,1,128], index: 3, kind: input, shape index: {}]
  %s4 = inlined_call_operand.hbm [shape: bf16[512,128], index: 4, kind: output, shape index: {}]
  %s5 = sld [smem:[#allocation0]]
  $region49: #{tpu_custom_call.1} parent=0
    _
  %s7 = ssub.s32 1, %s5
  %s8 = scalar_select 0, %s7, %s5
  $region1: #{tpu_custom_call.1} parent=0
    #allocation2 [shape = 'u8[131072]{0}', space=vmem, size = 0x20000, scoped, tag = 'output window, operand 0']
    #allocation3 [shape = 's32[2]{0}', space=sflag, size = 0x8, scoped, tag = 'scoped memory for tpu_custom_call.1']
    %9 = vsyncpa [#allocation3], 0
    %s10 = scalar_lea.sflag [#allocation3], 1
    %11 = vsyncpa %s10, 0
    loop: start=0, step=1, limit=4
    $region2: #{tpu_custom_call.1} parent=1 // loop_pre_header
      _
    $region3: #{tpu_custom_call.1} parent=1 // loop_header
      %s13 = sphi 0, %s17
      %p14 = scmp.ge.s32.totalorder %s13, 4
      %s23 = sphi 0, %s25
      %s26 = sphi 0, %s23
      %s27 = sphi 0, %s26
      %s43 = sphi 0, %s27
      %s47 = sphi 0, %s47
      %s49 = sphi 0, %s47
      %s50 = sphi 0, %s49
      %s64 = sphi 0, %s50
      %s68 = sphi 0, %s68
      %s70 = sphi 0, %s68
      %s71 = sphi 0, %s70
      %s85 = sphi 0, %s71
      %s89 = sphi 0, %s89
      %s91 = sphi 0, %s89
      %s92 = sphi 0, %s91
      %s106 = sphi 0, %s92
      %s112 = sphi 0, %s114
      %s115 = sphi 0, %s112
      %s116 = sphi 0, %s115
      %s132 = sphi 0, %s116
    $region4: #{tpu_custom_call.1} parent=1 // loop_header_branch
      %16 = sbr.rel (%p14) target = $region8
    $region5: #{tpu_custom_call.1} parent=1 // loop_body
      %s18 = ssub.s32 %s13, 1
      %s19 = ssub.s32 %s13, 2
      %s20 = sadd.s32 %s13, 1
      %s21 = ssub.s32 %s13, %s20
      %p22 = scmp.eq.s32.totalorder %s21, 0
      %s24 = sadd.s32 %s23, 1
      %s25 = scalar_select %p22, %s23, %s24
      %p28 = pneg %p22
      %p29 = scmp.eq.s32.totalorder %s13, 1
      %p30 = por %p28, %p29
      %p31 = scmp.ne.s32.totalorder %s23, %s26
      %p32 = scmp.eq.s32.totalorder %s13, 0
      %p33 = por %p31, %p32
      %p34 = scmp.ne.s32.totalorder %s23, %s26
      %p35 = scmp.eq.s32.totalorder %s18, 1
      %p36 = por %p34, %p35
      %p37 = scmp.ne.s32.totalorder %s26, %s27
      %p38 = scmp.eq.s32.totalorder %s18, 0
      %p39 = por %p37, %p38
      %p40 = scmp.ne.s32.totalorder %s26, %s27
      %p41 = scmp.eq.s32.totalorder %s19, 1
      %p42 = por %p40, %p41
      %p44 = scmp.ne.s32.totalorder %s27, %s43
      %p45 = scmp.eq.s32.totalorder %s19, 0
      %p46 = por %p44, %p45
      %s48 = sadd.s32 %s47, 1
      %p51 = scmp.eq.s32.totalorder %s13, 1
      %p52 = scmp.ne.s32.totalorder %s47, %s49
      %p53 = scmp.eq.s32.totalorder %s13, 0
      %p54 = por %p52, %p53
      %p55 = scmp.ne.s32.totalorder %s47, %s49
      %p56 = scmp.eq.s32.totalorder %s18, 1
      %p57 = por %p55, %p56
      %p58 = scmp.ne.s32.totalorder %s49, %s50
      %p59 = scmp.eq.s32.totalorder %s18, 0
      %p60 = por %p58, %p59
      %p61 = scmp.ne.s32.totalorder %s49, %s50
      %p62 = scmp.eq.s32.totalorder %s19, 1
      %p63 = por %p61, %p62
      %p65 = scmp.ne.s32.totalorder %s50, %s64
      %p66 = scmp.eq.s32.totalorder %s19, 0
      %p67 = por %p65, %p66
      %s69 = sadd.s32 %s68, 1
      %p72 = scmp.eq.s32.totalorder %s13, 1
      %p73 = scmp.ne.s32.totalorder %s68, %s70
      %p74 = scmp.eq.s32.totalorder %s13, 0
      %p75 = por %p73, %p74
      %p76 = scmp.ne.s32.totalorder %s68, %s70
      %p77 = scmp.eq.s32.totalorder %s18, 1
      %p78 = por %p76, %p77
      %p79 = scmp.ne.s32.totalorder %s70, %s71
      %p80 = scmp.eq.s32.totalorder %s18, 0
      %p81 = por %p79, %p80
      %p82 = scmp.ne.s32.totalorder %s70, %s71
      %p83 = scmp.eq.s32.totalorder %s19, 1
      %p84 = por %p82, %p83
      %p86 = scmp.ne.s32.totalorder %s71, %s85
      %p87 = scmp.eq.s32.totalorder %s19, 0
      %p88 = por %p86, %p87
      %s90 = sadd.s32 %s89, 1
      %p93 = scmp.eq.s32.totalorder %s13, 1
      %p94 = scmp.ne.s32.totalorder %s89, %s91
      %p95 = scmp.eq.s32.totalorder %s13, 0
      %p96 = por %p94, %p95
      %p97 = scmp.ne.s32.totalorder %s89, %s91
      %p98 = scmp.eq.s32.totalorder %s18, 1
      %p99 = por %p97, %p98
      %p100 = scmp.ne.s32.totalorder %s91, %s92
      %p101 = scmp.eq.s32.totalorder %s18, 0
      %p102 = por %p100, %p101
      %p103 = scmp.ne.s32.totalorder %s91, %s92
      %p104 = scmp.eq.s32.totalorder %s19, 1
      %p105 = por %p103, %p104
      %p107 = scmp.ne.s32.totalorder %s92, %s106
      %p108 = scmp.eq.s32.totalorder %s19, 0
      %p109 = por %p107, %p108
      %s110 = ssub.s32 %s13, %s20
      %p111 = scmp.eq.s32.totalorder %s110, 0
      %s113 = sadd.s32 %s112, 1
      %s114 = scalar_select %p111, %s112, %s113
      %p117 = pneg %p111
      %p118 = scmp.eq.s32.totalorder %s13, 1
      %p119 = por %p117, %p118
      %p120 = scmp.ne.s32.totalorder %s112, %s115
      %p121 = scmp.eq.s32.totalorder %s13, 0
      %p122 = por %p120, %p121
      %p123 = scmp.ne.s32.totalorder %s112, %s115
      %p124 = scmp.eq.s32.totalorder %s18, 1
      %p125 = por %p123, %p124
      %p126 = scmp.ne.s32.totalorder %s115, %s116
      %p127 = scmp.eq.s32.totalorder %s18, 0
      %p128 = por %p126, %p127
      %p129 = scmp.ne.s32.totalorder %s115, %s116
      %p130 = scmp.eq.s32.totalorder %s19, 1
      %p131 = por %p129, %p130
      %p133 = scmp.ne.s32.totalorder %s116, %s132
      %p134 = scmp.eq.s32.totalorder %s19, 0
      %p135 = por %p133, %p134
      %p136 = scmp.le.s32.totalorder 1, %s13
      %p137 = scmp.lt.s32.totalorder %s13, 3
      %p138 = pnand %p136, %p137
      %p139 = pneg %p138
      // Predicated region
      $region9: #{tpu_custom_call.1} parent=5 // pred_check
        _
      $region10: #{tpu_custom_call.1} parent=5 // pred_check_branch
        %141 = sbr.rel (%p138) target = $region12
      $region11: #{tpu_custom_call.1} parent=5 // pred_region
        %s142 = ssub.s32 %s13, 1
        // Predicated region
        $region13: #{tpu_custom_call.1} parent=11 // pred_check
          %p143 = pneg %p60
        $region14: #{tpu_custom_call.1} parent=11 // pred_check_branch
          %145 = sbr.rel (%p143) target = $region16
        $region15: #{tpu_custom_call.1} parent=11 // pred_region
          _
        $region16: #{tpu_custom_call.1} parent=11 // pred_fallthru
          _
        // Predicated region
        $region17: #{tpu_custom_call.1} parent=11 // pred_check
          %p146 = pneg %p81
        $region18: #{tpu_custom_call.1} parent=11 // pred_check_branch
          %148 = sbr.rel (%p146) target = $region20
        $region19: #{tpu_custom_call.1} parent=11 // pred_region
          _
        $region20: #{tpu_custom_call.1} parent=11 // pred_fallthru
          _
        // Predicated region
        $region21: #{tpu_custom_call.1} parent=11 // pred_check
          %p149 = pneg %p102
        $region22: #{tpu_custom_call.1} parent=11 // pred_check_branch
          %151 = sbr.rel (%p149) target = $region24
        $region23: #{tpu_custom_call.1} parent=11 // pred_region
          _
        $region24: #{tpu_custom_call.1} parent=11 // pred_fallthru
          _
      $region12: #{tpu_custom_call.1} parent=5 // pred_fallthru
        _
      %p152 = scmp.lt.s32.totalorder %s13, 2
      // Predicated region
      $region25: #{tpu_custom_call.1} parent=5 // pred_check
        %p153 = pneg %p152
      $region26: #{tpu_custom_call.1} parent=5 // pred_check_branch
        %155 = sbr.rel (%p153) target = $region28
      $region27: #{tpu_custom_call.1} parent=5 // pred_region
        // Predicated region
        $region29: #{tpu_custom_call.1} parent=27 // pred_check
          %p156 = pneg %p33
        $region30: #{tpu_custom_call.1} parent=27 // pred_check_branch
          %158 = sbr.rel (%p156) target = $region32
        $region31: #{tpu_custom_call.1} parent=27 // pred_region
          %s159 = smul.u32 32, %s13
          %p160 = scmp.lt.s32.totalorder %s159, 63
          %s161 = scalar_select %p160, %s159, 63
          %s162 = smul.addr %s161, 4
          %s163 = scalar_lea.vmem %s0, %s162
          %s164 = smul.u32 32, %s13
        $region32: #{tpu_custom_call.1} parent=27 // pred_fallthru
          _
      $region28: #{tpu_custom_call.1} parent=5 // pred_fallthru
        _
      %p165 = scmp.le.s32.totalorder 1, %s13
      %p166 = scmp.lt.s32.totalorder %s13, 3
      %p167 = pnand %p165, %p166
      %p168 = pneg %p167
      // Predicated region
      $region33: #{tpu_custom_call.1} parent=5 // pred_check
        _
      $region34: #{tpu_custom_call.1} parent=5 // pred_check_branch
        %170 = sbr.rel (%p167) target = $region36
      $region35: #{tpu_custom_call.1} parent=5 // pred_region
        %s171 = ssub.s32 %s13, 1
        %s172 = smul.u32 32, %s18
        %p173 = scmp.lt.s32.totalorder %s172, 63
        %s174 = scalar_select %p173, %s172, 63
        %s175 = smul.addr %s174, 4
        %s176 = scalar_lea.vmem %s0, %s175
        %p177 = pneg %p39
        %p178 = pneg %p36
        %p179 = pneg %p60
        %p180 = pneg %p57
        %p181 = pneg %p81
        %p182 = pneg %p78
        %p183 = pneg %p102
        %p184 = pneg %p99
        %p185 = pneg %p128
        %p186 = pneg %p125
        %s187 = sand.u32 %s115, 1
        %s188 = scalar_lea.sflag [#allocation3], %s187
        %s189 = sand.u32 %s115, 1
        %s190 = smul.addr %s189, 128
        %s191 = scalar_lea.vmem [#allocation2], %s190
        %s192 = smul.u32 32, %s18
        %p193 = scmp.lt.s32.totalorder %s192, 63
        %s194 = scalar_select %p193, %s192, 63
        %s195 = smul.addr %s194, 4
        %s196 = scalar_lea.vmem %s0, %s195
        %s197 = smul.u32 32, %s18
        %s198 = smul.u32 32, %s18
        %v200 = vld [vmem:[%s196] sm:$0xf]
        %v201 = vld [vmem:[%s196 + $0x4] sm:$0xf]
        %v202 = vld [vmem:[%s196 + $0x8] sm:$0xf]
        %v203 = vld [vmem:[%s196 + $0xc] sm:$0xf]
        %v204 = vld [vmem:[%s196 + $0x10] sm:$0xf]
        %v205 = vld [vmem:[%s196 + $0x14] sm:$0xf]
        %v206 = vld [vmem:[%s196 + $0x18] sm:$0xf]
        %v207 = vld [vmem:[%s196 + $0x1c] sm:$0xf]
        %v208 = vld [vmem:[%s196 + $0x20] sm:$0xf]
        %v209 = vld [vmem:[%s196 + $0x24] sm:$0xf]
        %v210 = vld [vmem:[%s196 + $0x28] sm:$0xf]
        %v211 = vld [vmem:[%s196 + $0x2c] sm:$0xf]
        %v212 = vld [vmem:[%s196 + $0x30] sm:$0xf]
        %v213 = vld [vmem:[%s196 + $0x34] sm:$0xf]
        %v214 = vld [vmem:[%s196 + $0x38] sm:$0xf]
        %v215 = vld [vmem:[%s196 + $0x3c] sm:$0xf]
        %v216 = vld [vmem:[%s196 + $0x40] sm:$0xf]
        %v217 = vld [vmem:[%s196 + $0x44] sm:$0xf]
        %v218 = vld [vmem:[%s196 + $0x48] sm:$0xf]
        %v219 = vld [vmem:[%s196 + $0x4c] sm:$0xf]
        %v220 = vld [vmem:[%s196 + $0x50] sm:$0xf]
        %v221 = vld [vmem:[%s196 + $0x54] sm:$0xf]
        %v222 = vld [vmem:[%s196 + $0x58] sm:$0xf]
        %v223 = vld [vmem:[%s196 + $0x5c] sm:$0xf]
        %v224 = vld [vmem:[%s196 + $0x60] sm:$0xf]
        %v225 = vld [vmem:[%s196 + $0x64] sm:$0xf]
        %v226 = vld [vmem:[%s196 + $0x68] sm:$0xf]
        %v227 = vld [vmem:[%s196 + $0x6c] sm:$0xf]
        %v228 = vld [vmem:[%s196 + $0x70] sm:$0xf]
        %v229 = vld [vmem:[%s196 + $0x74] sm:$0xf]
        %v230 = vld [vmem:[%s196 + $0x78] sm:$0xf]
        %v231 = vld [vmem:[%s196 + $0x7c] sm:$0xf]
        %v232 = vld [vmem:[%s1] sm:$0xf]
        %v233 = vld [vmem:[%s1 + $0x4] sm:$0xf]
        %v234 = vld [vmem:[%s1 + $0x8] sm:$0xf]
        %v235 = vld [vmem:[%s1 + $0xc] sm:$0xf]
        %v236 = vld [vmem:[%s3] sm:$0x1]
        %v238 = vlaneseq
        %v239 = vshrl.u32 %v238, 7
        %v240 = vsub.s32 0, %v239
        %v241 = vrot.slane %v236, %v240
        %v275 = vunpack.c.l.b16 %v200
        %v276 = vunpack.c.l.b16 %v201
        %v277 = vunpack.c.l.b16 %v202
        %v278 = vunpack.c.l.b16 %v203
        %v279 = vunpack.c.l.b16 %v204
        %v280 = vunpack.c.l.b16 %v205
        %v281 = vunpack.c.l.b16 %v206
        %v282 = vunpack.c.l.b16 %v207
        %v283 = vunpack.c.l.b16 %v208
        %v284 = vunpack.c.l.b16 %v209
        %v285 = vunpack.c.l.b16 %v210
        %v286 = vunpack.c.l.b16 %v211
        %v287 = vunpack.c.l.b16 %v212
        %v288 = vunpack.c.l.b16 %v213
        %v289 = vunpack.c.l.b16 %v214
        %v290 = vunpack.c.l.b16 %v215
        %v291 = vunpack.c.l.b16 %v216
        %v292 = vunpack.c.l.b16 %v217
        %v293 = vunpack.c.l.b16 %v218
        %v294 = vunpack.c.l.b16 %v219
        %v295 = vunpack.c.l.b16 %v220
        %v296 = vunpack.c.l.b16 %v221
        %v297 = vunpack.c.l.b16 %v222
        %v298 = vunpack.c.l.b16 %v223
        %v299 = vunpack.c.l.b16 %v224
        %v300 = vunpack.c.l.b16 %v225
        %v301 = vunpack.c.l.b16 %v226
        %v302 = vunpack.c.l.b16 %v227
        %v303 = vunpack.c.l.b16 %v228
        %v304 = vunpack.c.l.b16 %v229
        %v305 = vunpack.c.l.b16 %v230
        %v306 = vunpack.c.l.b16 %v231
        %v307 = vpack.c.b16 %v276, %v275
        %v308 = vpack.c.b16 %v278, %v277
        %v309 = vpack.c.b16 %v280, %v279
        %v310 = vpack.c.b16 %v282, %v281
        %v311 = vpack.c.b16 %v284, %v283
        %v312 = vpack.c.b16 %v286, %v285
        %v313 = vpack.c.b16 %v288, %v287
        %v314 = vpack.c.b16 %v290, %v289
        %v315 = vpack.c.b16 %v292, %v291
        %v316 = vpack.c.b16 %v294, %v293
        %v317 = vpack.c.b16 %v296, %v295
        %v318 = vpack.c.b16 %v298, %v297
        %v319 = vpack.c.b16 %v300, %v299
        %v320 = vpack.c.b16 %v302, %v301
        %v321 = vpack.c.b16 %v304, %v303
        %v322 = vpack.c.b16 %v306, %v305
        %v327 = vunpack.c.l.b16 %v232
        %v328 = vunpack.c.l.b16 %v233
        %v329 = vunpack.c.l.b16 %v234
        %v330 = vunpack.c.l.b16 %v235
        %v331 = vpack.c.b16 %v328, %v327
        %v332 = vpack.c.b16 %v330, %v329
        %vm335 = vcmask 261120
        %v337 = vsel %vm335, %v307, 0
        %v340 = vsel %vm335, %v308, 0
        %v343 = vsel %vm335, %v309, 0
        %v346 = vsel %vm335, %v310, 0
        %v349 = vsel %vm335, %v311, 0
        %v352 = vsel %vm335, %v312, 0
        %v355 = vsel %vm335, %v313, 0
        %v358 = vsel %vm335, %v314, 0
        %v361 = vsel %vm335, %v315, 0
        %v364 = vsel %vm335, %v316, 0
        %v367 = vsel %vm335, %v317, 0
        %v370 = vsel %vm335, %v318, 0
        %v373 = vsel %vm335, %v319, 0
        %v376 = vsel %vm335, %v320, 0
        %v379 = vsel %vm335, %v321, 0
        %v382 = vsel %vm335, %v322, 0
        %384 = vmatprep.subr.bf16.mxu0 0
        %385 = vmatpush1.bf16.msra.mxu0 %v331
        %386 = vmatprep.subr.bf16.mxu0 0
        %387 = vmatpush1.bf16.msra.mxu0 %v332
        %388 = vmatprep.subr.bf16.mxu0 0
        %389 = vmatpush1.bf16.msra.mxu0 0
        %390 = vmatprep.subr.bf16.mxu0 0
        %391 = vmatpush1.bf16.msra.mxu0 0
        %392 = vmatprep.subr.bf16.mxu0 0
        %393 = vmatpush1.bf16.msra.mxu0 0
        %394 = vmatprep.subr.bf16.mxu0 0
        %395 = vmatpush1.bf16.msra.mxu0 0
        %396 = vmatprep.subr.bf16.mxu0 0
        %397 = vmatpush1.bf16.msra.mxu0 0
        %398 = vmatprep.subr.bf16.mxu0 0
        %399 = vmatpush1.bf16.msra.mxu0 0
        %400 = vmatprep.subr.bf16.mxu0 0
        %401 = vmatpush1.bf16.msra.mxu0 0
        %402 = vmatprep.subr.bf16.mxu0 0
        %403 = vmatpush1.bf16.msra.mxu0 0
        %404 = vmatprep.subr.bf16.mxu0 0
        %405 = vmatpush1.bf16.msra.mxu0 0
        %406 = vmatprep.subr.bf16.mxu0 0
        %407 = vmatpush1.bf16.msra.mxu0 0
        %408 = vmatprep.subr.bf16.mxu0 0
        %409 = vmatpush1.bf16.msra.mxu0 0
        %410 = vmatprep.subr.bf16.mxu0 0
        %411 = vmatpush1.bf16.msra.mxu0 0
        %412 = vmatprep.subr.bf16.mxu0 0
        %413 = vmatpush1.bf16.msra.mxu0 0
        %414 = vmatprep.subr.bf16.mxu0 0
        %415 = vmatpush1.bf16.msra.mxu0 0
        %416 = vmatprep.mubr.bf16.mxu0 0
        %417 = vmatmul.mubr.bf16.gmra.mrb[0].mxu0 %v337
        %v418 = vpop.f32.mrb[0].mxu0
        %v419 = vadd.f32 %v241, %v418
        %v420 = vpop.f32.mrb[0].mxu0
        %v421 = vpop.f32.mrb[0].mxu0
        %v422 = vadd.f32 %v241, %v421
        %v423 = vpop.f32.mrb[0].mxu0
        %424 = vmatprep.mubr.bf16.mxu0 0
        %425 = vmatmul.mubr.bf16.gmra.mrb[0].mxu0 %v340
        %v426 = vpop.f32.mrb[0].mxu0
        %v427 = vadd.f32 %v241, %v426
        %v428 = vpop.f32.mrb[0].mxu0
        %v429 = vpop.f32.mrb[0].mxu0
        %v430 = vadd.f32 %v241, %v429
        %v431 = vpop.f32.mrb[0].mxu0
        %432 = vmatprep.mubr.bf16.mxu0 0
        %433 = vmatmul.mubr.bf16.gmra.mrb[0].mxu0 %v343
        %v434 = vpop.f32.mrb[0].mxu0
        %v435 = vadd.f32 %v241, %v434
        %v436 = vpop.f32.mrb[0].mxu0
        %v437 = vpop.f32.mrb[0].mxu0
        %v438 = vadd.f32 %v241, %v437
        %v439 = vpop.f32.mrb[0].mxu0
        %440 = vmatprep.mubr.bf16.mxu0 0
        %441 = vmatmul.mubr.bf16.gmra.mrb[0].mxu0 %v346
        %v442 = vpop.f32.mrb[0].mxu0
        %v443 = vadd.f32 %v241, %v442
        %v444 = vpop.f32.mrb[0].mxu0
        %v445 = vpop.f32.mrb[0].mxu0
        %v446 = vadd.f32 %v241, %v445
        %v447 = vpop.f32.mrb[0].mxu0
        %448 = vmatprep.mubr.bf16.mxu0 0
        %449 = vmatmul.mubr.bf16.gmra.mrb[0].mxu0 %v349
        %v450 = vpop.f32.mrb[0].mxu0
        %v451 = vadd.f32 %v241, %v450
        %v452 = vpop.f32.mrb[0].mxu0
        %v453 = vpop.f32.mrb[0].mxu0
        %v454 = vadd.f32 %v241, %v453
        %v455 = vpop.f32.mrb[0].mxu0
        %456 = vmatprep.mubr.bf16.mxu0 0
        %457 = vmatmul.mubr.bf16.gmra.mrb[0].mxu0 %v352
        %v458 = vpop.f32.mrb[0].mxu0
        %v459 = vadd.f32 %v241, %v458
        %v460 = vpop.f32.mrb[0].mxu0
        %v461 = vpop.f32.mrb[0].mxu0
        %v462 = vadd.f32 %v241, %v461
        %v463 = vpop.f32.mrb[0].mxu0
        %464 = vmatprep.mubr.bf16.mxu0 0
        %465 = vmatmul.mubr.bf16.gmra.mrb[0].mxu0 %v355
        %v466 = vpop.f32.mrb[0].mxu0
        %v467 = vadd.f32 %v241, %v466
        %v468 = vpop.f32.mrb[0].mxu0
        %v469 = vpop.f32.mrb[0].mxu0
        %v470 = vadd.f32 %v241, %v469
        %v471 = vpop.f32.mrb[0].mxu0
        %472 = vmatprep.mubr.bf16.mxu0 0
        %473 = vmatmul.mubr.bf16.gmra.mrb[0].mxu0 %v358
        %v474 = vpop.f32.mrb[0].mxu0
        %v475 = vadd.f32 %v241, %v474
        %v476 = vpop.f32.mrb[0].mxu0
        %v477 = vpop.f32.mrb[0].mxu0
        %v478 = vadd.f32 %v241, %v477
        %v479 = vpop.f32.mrb[0].mxu0
        %480 = vmatprep.mubr.bf16.mxu0 0
        %481 = vmatmul.mubr.bf16.gmra.mrb[0].mxu0 %v361
        %v482 = vpop.f32.mrb[0].mxu0
        %v483 = vadd.f32 %v241, %v482
        %v484 = vpop.f32.mrb[0].mxu0
        %v485 = vpop.f32.mrb[0].mxu0
        %v486 = vadd.f32 %v241, %v485
        %v487 = vpop.f32.mrb[0].mxu0
        %488 = vmatprep.mubr.bf16.mxu0 0
        %489 = vmatmul.mubr.bf16.gmra.mrb[0].mxu0 %v364
        %v490 = vpop.f32.mrb[0].mxu0
        %v491 = vadd.f32 %v241, %v490
        %v492 = vpop.f32.mrb[0].mxu0
        %v493 = vpop.f32.mrb[0].mxu0
        %v494 = vadd.f32 %v241, %v493
        %v495 = vpop.f32.mrb[0].mxu0
        %496 = vmatprep.mubr.bf16.mxu0 0
        %497 = vmatmul.mubr.bf16.gmra.mrb[0].mxu0 %v367
        %v498 = vpop.f32.mrb[0].mxu0
        %v499 = vadd.f32 %v241, %v498
        %v500 = vpop.f32.mrb[0].mxu0
        %v501 = vpop.f32.mrb[0].mxu0
        %v502 = vadd.f32 %v241, %v501
        %v503 = vpop.f32.mrb[0].mxu0
        %504 = vmatprep.mubr.bf16.mxu0 0
        %505 = vmatmul.mubr.bf16.gmra.mrb[0].mxu0 %v370
        %v506 = vpop.f32.mrb[0].mxu0
        %v507 = vadd.f32 %v241, %v506
        %v508 = vpop.f32.mrb[0].mxu0
        %v509 = vpop.f32.mrb[0].mxu0
        %v510 = vadd.f32 %v241, %v509
        %v511 = vpop.f32.mrb[0].mxu0
        %512 = vmatprep.mubr.bf16.mxu0 0
        %513 = vmatmul.mubr.bf16.gmra.mrb[0].mxu0 %v373
        %v514 = vpop.f32.mrb[0].mxu0
        %v515 = vadd.f32 %v241, %v514
        %v516 = vpop.f32.mrb[0].mxu0
        %v517 = vpop.f32.mrb[0].mxu0
        %v518 = vadd.f32 %v241, %v517
        %v519 = vpop.f32.mrb[0].mxu0
        %520 = vmatprep.mubr.bf16.mxu0 0
        %521 = vmatmul.mubr.bf16.gmra.mrb[0].mxu0 %v376
        %v522 = vpop.f32.mrb[0].mxu0
        %v523 = vadd.f32 %v241, %v522
        %v524 = vpop.f32.mrb[0].mxu0
        %v525 = vpop.f32.mrb[0].mxu0
        %v526 = vadd.f32 %v241, %v525
        %v527 = vpop.f32.mrb[0].mxu0
        %528 = vmatprep.mubr.bf16.mxu0 0
        %529 = vmatmul.mubr.bf16.gmra.mrb[0].mxu0 %v379
        %v530 = vpop.f32.mrb[0].mxu0
        %v531 = vadd.f32 %v241, %v530
        %v532 = vpop.f32.mrb[0].mxu0
        %v533 = vpop.f32.mrb[0].mxu0
        %v534 = vadd.f32 %v241, %v533
        %v535 = vpop.f32.mrb[0].mxu0
        %536 = vmatprep.mubr.bf16.mxu0 0
        %537 = vmatmul.mubr.bf16.gmra.mrb[0].mxu0 %v382
        %v538 = vpop.f32.mrb[0].mxu0
        %v539 = vadd.f32 %v241, %v538
        %v540 = vpop.f32.mrb[0].mxu0
        %v541 = vpop.f32.mrb[0].mxu0
        %v542 = vadd.f32 %v241, %v541
        %v543 = vpop.f32.mrb[0].mxu0
        %544 = vdwg.mxu0
        %v545 = vmax.f32 %v419, 0.0
        %v546 = vmax.f32 %v422, 0.0
        %v547 = vmax.f32 %v427, 0.0
        %v548 = vmax.f32 %v430, 0.0
        %v549 = vmax.f32 %v435, 0.0
        %v550 = vmax.f32 %v438, 0.0
        %v551 = vmax.f32 %v443, 0.0
        %v552 = vmax.f32 %v446, 0.0
        %v553 = vmax.f32 %v451, 0.0
        %v554 = vmax.f32 %v454, 0.0
        %v555 = vmax.f32 %v459, 0.0
        %v556 = vmax.f32 %v462, 0.0
        %v557 = vmax.f32 %v467, 0.0
        %v558 = vmax.f32 %v470, 0.0
        %v559 = vmax.f32 %v475, 0.0
        %v560 = vmax.f32 %v478, 0.0
        %v561 = vmax.f32 %v483, 0.0
        %v562 = vmax.f32 %v486, 0.0
        %v563 = vmax.f32 %v491, 0.0
        %v564 = vmax.f32 %v494, 0.0
        %v565 = vmax.f32 %v499, 0.0
        %v566 = vmax.f32 %v502, 0.0
        %v567 = vmax.f32 %v507, 0.0
        %v568 = vmax.f32 %v510, 0.0
        %v569 = vmax.f32 %v515, 0.0
        %v570 = vmax.f32 %v518, 0.0
        %v571 = vmax.f32 %v523, 0.0
        %v572 = vmax.f32 %v526, 0.0
        %v573 = vmax.f32 %v531, 0.0
        %v574 = vmax.f32 %v534, 0.0
        %v575 = vmax.f32 %v539, 0.0
        %v576 = vmax.f32 %v542, 0.0
        %v577 = vpack.c.bf16 %v546, %v545
        %v578 = vpack.c.bf16 %v548, %v547
        %v579 = vpack.c.bf16 %v550, %v549
        %v580 = vpack.c.bf16 %v552, %v551
        %v581 = vpack.c.bf16 %v554, %v553
        %v582 = vpack.c.bf16 %v556, %v555
        %v583 = vpack.c.bf16 %v558, %v557
        %v584 = vpack.c.bf16 %v560, %v559
        %v585 = vpack.c.bf16 %v562, %v561
        %v586 = vpack.c.bf16 %v564, %v563
        %v587 = vpack.c.bf16 %v566, %v565
        %v588 = vpack.c.bf16 %v568, %v567
        %v589 = vpack.c.bf16 %v570, %v569
        %v590 = vpack.c.bf16 %v572, %v571
        %v591 = vpack.c.bf16 %v574, %v573
        %v592 = vpack.c.bf16 %v576, %v575
        %v593 = vld [vmem:[%s2] sm:$0xf]
        %v594 = vld [vmem:[%s2 + $0x4] sm:$0xf]
        %v595 = vld [vmem:[%s2 + $0x8] sm:$0xf]
        %v596 = vld [vmem:[%s2 + $0xc] sm:$0xf]
        %v597 = vld [vmem:[%s2 + $0x10] sm:$0xf]
        %v598 = vld [vmem:[%s2 + $0x14] sm:$0xf]
        %v599 = vld [vmem:[%s2 + $0x18] sm:$0xf]
        %v600 = vld [vmem:[%s2 + $0x1c] sm:$0xf]
        %v601 = vld [vmem:[%s2 + $0x20] sm:$0xf]
        %v602 = vld [vmem:[%s2 + $0x24] sm:$0xf]
        %v603 = vld [vmem:[%s2 + $0x28] sm:$0xf]
        %v604 = vld [vmem:[%s2 + $0x2c] sm:$0xf]
        %v605 = vld [vmem:[%s2 + $0x30] sm:$0xf]
        %v606 = vld [vmem:[%s2 + $0x34] sm:$0xf]
        %v607 = vld [vmem:[%s2 + $0x38] sm:$0xf]
        %v608 = vld [vmem:[%s2 + $0x3c] sm:$0xf]
        %s609 = scalar_lea.vmem %s3, 1
        %v610 = vld [vmem:[%s609] sm:$0x1]
        %v612 = vlaneseq
        %v613 = vshrl.u32 %v612, 7
        %v614 = vsub.s32 0, %v613
        %v615 = vrot.slane %v610, %v614
        %v633 = vunpack.c.l.b16 %v593
        %v634 = vunpack.c.l.b16 %v594
        %v635 = vunpack.c.l.b16 %v595
        %v636 = vunpack.c.l.b16 %v596
        %v637 = vunpack.c.l.b16 %v597
        %v638 = vunpack.c.l.b16 %v598
        %v639 = vunpack.c.l.b16 %v599
        %v640 = vunpack.c.l.b16 %v600
        %v641 = vunpack.c.l.b16 %v601
        %v642 = vunpack.c.l.b16 %v602
        %v643 = vunpack.c.l.b16 %v603
        %v644 = vunpack.c.l.b16 %v604
        %v645 = vunpack.c.l.b16 %v605
        %v646 = vunpack.c.l.b16 %v606
        %v647 = vunpack.c.l.b16 %v607
        %v648 = vunpack.c.l.b16 %v608
        %v649 = vpack.c.b16 %v634, %v633
        %v650 = vpack.c.b16 %v636, %v635
        %v651 = vpack.c.b16 %v638, %v637
        %v652 = vpack.c.b16 %v640, %v639
        %v653 = vpack.c.b16 %v642, %v641
        %v654 = vpack.c.b16 %v644, %v643
        %v655 = vpack.c.b16 %v646, %v645
        %v656 = vpack.c.b16 %v648, %v647
        %665 = vmatprep.subr.bf16.mxu0 0
        %666 = vmatpush1.bf16.msra.mxu0 %v649
        %667 = vmatprep.subr.bf16.mxu0 0
        %668 = vmatpush1.bf16.msra.mxu0 %v650
        %669 = vmatprep.subr.bf16.mxu0 0
        %670 = vmatpush1.bf16.msra.mxu0 %v651
        %671 = vmatprep.subr.bf16.mxu0 0
        %672 = vmatpush1.bf16.msra.mxu0 %v652
        %673 = vmatprep.subr.bf16.mxu0 0
        %674 = vmatpush1.bf16.msra.mxu0 %v653
        %675 = vmatprep.subr.bf16.mxu0 0
        %676 = vmatpush1.bf16.msra.mxu0 %v654
        %677 = vmatprep.subr.bf16.mxu0 0
        %678 = vmatpush1.bf16.msra.mxu0 %v655
        %679 = vmatprep.subr.bf16.mxu0 0
        %680 = vmatpush1.bf16.msra.mxu0 %v656
        %681 = vmatprep.subr.bf16.mxu0 0
        %682 = vmatpush1.bf16.msra.mxu0 0
        %683 = vmatprep.subr.bf16.mxu0 0
        %684 = vmatpush1.bf16.msra.mxu0 0
        %685 = vmatprep.subr.bf16.mxu0 0
        %686 = vmatpush1.bf16.msra.mxu0 0
        %687 = vmatprep.subr.bf16.mxu0 0
        %688 = vmatpush1.bf16.msra.mxu0 0
        %689 = vmatprep.subr.bf16.mxu0 0
        %690 = vmatpush1.bf16.msra.mxu0 0
        %691 = vmatprep.subr.bf16.mxu0 0
        %692 = vmatpush1.bf16.msra.mxu0 0
        %693 = vmatprep.subr.bf16.mxu0 0
        %694 = vmatpush1.bf16.msra.mxu0 0
        %695 = vmatprep.subr.bf16.mxu0 0
        %696 = vmatpush1.bf16.msra.mxu0 0
        %697 = vmatprep.mubr.bf16.mxu0 0
        %698 = vmatmul.mubr.bf16.gmra.mrb[0].mxu0 %v577
        %v699 = vpop.f32.mrb[0].mxu0
        %v700 = vadd.f32 %v615, %v699
        %v701 = vpop.f32.mrb[0].mxu0
        %v702 = vpop.f32.mrb[0].mxu0
        %v703 = vadd.f32 %v615, %v702
        %v704 = vpop.f32.mrb[0].mxu0
        %705 = vmatprep.mubr.bf16.mxu0 0
        %706 = vmatmul.mubr.bf16.gmra.mrb[0].mxu0 %v578
        %v707 = vpop.f32.mrb[0].mxu0
        %v708 = vadd.f32 %v615, %v707
        %v709 = vpop.f32.mrb[0].mxu0
        %v710 = vpop.f32.mrb[0].mxu0
        %v711 = vadd.f32 %v615, %v710
        %v712 = vpop.f32.mrb[0].mxu0
        %713 = vmatprep.mubr.bf16.mxu0 0
        %714 = vmatmul.mubr.bf16.gmra.mrb[0].mxu0 %v579
        %v715 = vpop.f32.mrb[0].mxu0
        %v716 = vadd.f32 %v615, %v715
        %v717 = vpop.f32.mrb[0].mxu0
        %v718 = vpop.f32.mrb[0].mxu0
        %v719 = vadd.f32 %v615, %v718
        %v720 = vpop.f32.mrb[0].mxu0
        %721 = vmatprep.mubr.bf16.mxu0 0
        %722 = vmatmul.mubr.bf16.gmra.mrb[0].mxu0 %v580
        %v723 = vpop.f32.mrb[0].mxu0
        %v724 = vadd.f32 %v615, %v723
        %v725 = vpop.f32.mrb[0].mxu0
        %v726 = vpop.f32.mrb[0].mxu0
        %v727 = vadd.f32 %v615, %v726
        %v728 = vpop.f32.mrb[0].mxu0
        %729 = vmatprep.mubr.bf16.mxu0 0
        %730 = vmatmul.mubr.bf16.gmra.mrb[0].mxu0 %v581
        %v731 = vpop.f32.mrb[0].mxu0
        %v732 = vadd.f32 %v615, %v731
        %v733 = vpop.f32.mrb[0].mxu0
        %v734 = vpop.f32.mrb[0].mxu0
        %v735 = vadd.f32 %v615, %v734
        %v736 = vpop.f32.mrb[0].mxu0
        %737 = vmatprep.mubr.bf16.mxu0 0
        %738 = vmatmul.mubr.bf16.gmra.mrb[0].mxu0 %v582
        %v739 = vpop.f32.mrb[0].mxu0
        %v740 = vadd.f32 %v615, %v739
        %v741 = vpop.f32.mrb[0].mxu0
        %v742 = vpop.f32.mrb[0].mxu0
        %v743 = vadd.f32 %v615, %v742
        %v744 = vpop.f32.mrb[0].mxu0
        %745 = vmatprep.mubr.bf16.mxu0 0
        %746 = vmatmul.mubr.bf16.gmra.mrb[0].mxu0 %v583
        %v747 = vpop.f32.mrb[0].mxu0
        %v748 = vadd.f32 %v615, %v747
        %v749 = vpop.f32.mrb[0].mxu0
        %v750 = vpop.f32.mrb[0].mxu0
        %v751 = vadd.f32 %v615, %v750
        %v752 = vpop.f32.mrb[0].mxu0
        %753 = vmatprep.mubr.bf16.mxu0 0
        %754 = vmatmul.mubr.bf16.gmra.mrb[0].mxu0 %v584
        %v755 = vpop.f32.mrb[0].mxu0
        %v756 = vadd.f32 %v615, %v755
        %v757 = vpop.f32.mrb[0].mxu0
        %v758 = vpop.f32.mrb[0].mxu0
        %v759 = vadd.f32 %v615, %v758
        %v760 = vpop.f32.mrb[0].mxu0
        %761 = vmatprep.mubr.bf16.mxu0 0
        %762 = vmatmul.mubr.bf16.gmra.mrb[0].mxu0 %v585
        %v763 = vpop.f32.mrb[0].mxu0
        %v764 = vadd.f32 %v615, %v763
        %v765 = vpop.f32.mrb[0].mxu0
        %v766 = vpop.f32.mrb[0].mxu0
        %v767 = vadd.f32 %v615, %v766
        %v768 = vpop.f32.mrb[0].mxu0
        %769 = vmatprep.mubr.bf16.mxu0 0
        %770 = vmatmul.mubr.bf16.gmra.mrb[0].mxu0 %v586
        %v771 = vpop.f32.mrb[0].mxu0
        %v772 = vadd.f32 %v615, %v771
        %v773 = vpop.f32.mrb[0].mxu0
        %v774 = vpop.f32.mrb[0].mxu0
        %v775 = vadd.f32 %v615, %v774
        %v776 = vpop.f32.mrb[0].mxu0
        %777 = vmatprep.mubr.bf16.mxu0 0
        %778 = vmatmul.mubr.bf16.gmra.mrb[0].mxu0 %v587
        %v779 = vpop.f32.mrb[0].mxu0
        %v780 = vadd.f32 %v615, %v779
        %v781 = vpop.f32.mrb[0].mxu0
        %v782 = vpop.f32.mrb[0].mxu0
        %v783 = vadd.f32 %v615, %v782
        %v784 = vpop.f32.mrb[0].mxu0
        %785 = vmatprep.mubr.bf16.mxu0 0
        %786 = vmatmul.mubr.bf16.gmra.mrb[0].mxu0 %v588
        %v787 = vpop.f32.mrb[0].mxu0
        %v788 = vadd.f32 %v615, %v787
        %v789 = vpop.f32.mrb[0].mxu0
        %v790 = vpop.f32.mrb[0].mxu0
        %v791 = vadd.f32 %v615, %v790
        %v792 = vpop.f32.mrb[0].mxu0
        %793 = vmatprep.mubr.bf16.mxu0 0
        %794 = vmatmul.mubr.bf16.gmra.mrb[0].mxu0 %v589
        %v795 = vpop.f32.mrb[0].mxu0
        %v796 = vadd.f32 %v615, %v795
        %v797 = vpop.f32.mrb[0].mxu0
        %v798 = vpop.f32.mrb[0].mxu0
        %v799 = vadd.f32 %v615, %v798
        %v800 = vpop.f32.mrb[0].mxu0
        %801 = vmatprep.mubr.bf16.mxu0 0
        %802 = vmatmul.mubr.bf16.gmra.mrb[0].mxu0 %v590
        %v803 = vpop.f32.mrb[0].mxu0
        %v804 = vadd.f32 %v615, %v803
        %v805 = vpop.f32.mrb[0].mxu0
        %v806 = vpop.f32.mrb[0].mxu0
        %v807 = vadd.f32 %v615, %v806
        %v808 = vpop.f32.mrb[0].mxu0
        %809 = vmatprep.mubr.bf16.mxu0 0
        %810 = vmatmul.mubr.bf16.gmra.mrb[0].mxu0 %v591
        %v811 = vpop.f32.mrb[0].mxu0
        %v812 = vadd.f32 %v615, %v811
        %v813 = vpop.f32.mrb[0].mxu0
        %v814 = vpop.f32.mrb[0].mxu0
        %v815 = vadd.f32 %v615, %v814
        %v816 = vpop.f32.mrb[0].mxu0
        %817 = vmatprep.mubr.bf16.mxu0 0
        %818 = vmatmul.mubr.bf16.gmra.mrb[0].mxu0 %v592
        %v819 = vpop.f32.mrb[0].mxu0
        %v820 = vadd.f32 %v615, %v819
        %v821 = vpop.f32.mrb[0].mxu0
        %v822 = vpop.f32.mrb[0].mxu0
        %v823 = vadd.f32 %v615, %v822
        %v824 = vpop.f32.mrb[0].mxu0
        %825 = vdwg.mxu0
        %v826 = vmax.f32 %v700, 0.0
        %v827 = vmax.f32 %v703, 0.0
        %v828 = vmax.f32 %v708, 0.0
        %v829 = vmax.f32 %v711, 0.0
        %v830 = vmax.f32 %v716, 0.0
        %v831 = vmax.f32 %v719, 0.0
        %v832 = vmax.f32 %v724, 0.0
        %v833 = vmax.f32 %v727, 0.0
        %v834 = vmax.f32 %v732, 0.0
        %v835 = vmax.f32 %v735, 0.0
        %v836 = vmax.f32 %v740, 0.0
        %v837 = vmax.f32 %v743, 0.0
        %v838 = vmax.f32 %v748, 0.0
        %v839 = vmax.f32 %v751, 0.0
        %v840 = vmax.f32 %v756, 0.0
        %v841 = vmax.f32 %v759, 0.0
        %v842 = vmax.f32 %v764, 0.0
        %v843 = vmax.f32 %v767, 0.0
        %v844 = vmax.f32 %v772, 0.0
        %v845 = vmax.f32 %v775, 0.0
        %v846 = vmax.f32 %v780, 0.0
        %v847 = vmax.f32 %v783, 0.0
        %v848 = vmax.f32 %v788, 0.0
        %v849 = vmax.f32 %v791, 0.0
        %v850 = vmax.f32 %v796, 0.0
        %v851 = vmax.f32 %v799, 0.0
        %v852 = vmax.f32 %v804, 0.0
        %v853 = vmax.f32 %v807, 0.0
        %v854 = vmax.f32 %v812, 0.0
        %v855 = vmax.f32 %v815, 0.0
        %v856 = vmax.f32 %v820, 0.0
        %v857 = vmax.f32 %v823, 0.0
        %v858 = vpack.c.bf16 %v827, %v826
        %v859 = vpack.c.bf16 %v829, %v828
        %v860 = vpack.c.bf16 %v831, %v830
        %v861 = vpack.c.bf16 %v833, %v832
        %v862 = vpack.c.bf16 %v835, %v834
        %v863 = vpack.c.bf16 %v837, %v836
        %v864 = vpack.c.bf16 %v839, %v838
        %v865 = vpack.c.bf16 %v841, %v840
        %v866 = vpack.c.bf16 %v843, %v842
        %v867 = vpack.c.bf16 %v845, %v844
        %v868 = vpack.c.bf16 %v847, %v846
        %v869 = vpack.c.bf16 %v849, %v848
        %v870 = vpack.c.bf16 %v851, %v850
        %v871 = vpack.c.bf16 %v853, %v852
        %v872 = vpack.c.bf16 %v855, %v854
        %v873 = vpack.c.bf16 %v857, %v856
        %s874 = scalar_lea.vmem %s2, 64
        %v875 = vld [vmem:[%s874] sm:$0xf]
        %v876 = vld [vmem:[%s874 + $0x4] sm:$0xf]
        %v877 = vld [vmem:[%s874 + $0x8] sm:$0xf]
        %v878 = vld [vmem:[%s874 + $0xc] sm:$0xf]
        %v879 = vld [vmem:[%s874 + $0x10] sm:$0xf]
        %v880 = vld [vmem:[%s874 + $0x14] sm:$0xf]
        %v881 = vld [vmem:[%s874 + $0x18] sm:$0xf]
        %v882 = vld [vmem:[%s874 + $0x1c] sm:$0xf]
        %v883 = vld [vmem:[%s874 + $0x20] sm:$0xf]
        %v884 = vld [vmem:[%s874 + $0x24] sm:$0xf]
        %v885 = vld [vmem:[%s874 + $0x28] sm:$0xf]
        %v886 = vld [vmem:[%s874 + $0x2c] sm:$0xf]
        %v887 = vld [vmem:[%s874 + $0x30] sm:$0xf]
        %v888 = vld [vmem:[%s874 + $0x34] sm:$0xf]
        %v889 = vld [vmem:[%s874 + $0x38] sm:$0xf]
        %v890 = vld [vmem:[%s874 + $0x3c] sm:$0xf]
        %s891 = scalar_lea.vmem %s3, 2
        %v892 = vld [vmem:[%s891] sm:$0x1]
        %v894 = vlaneseq
        %v895 = vshrl.u32 %v894, 7
        %v896 = vsub.s32 0, %v895
        %v897 = vrot.slane %v892, %v896
        %v915 = vunpack.c.l.b16 %v875
        %v916 = vunpack.c.l.b16 %v876
        %v917 = vunpack.c.l.b16 %v877
        %v918 = vunpack.c.l.b16 %v878
        %v919 = vunpack.c.l.b16 %v879
        %v920 = vunpack.c.l.b16 %v880
        %v921 = vunpack.c.l.b16 %v881
        %v922 = vunpack.c.l.b16 %v882
        %v923 = vunpack.c.l.b16 %v883
        %v924 = vunpack.c.l.b16 %v884
        %v925 = vunpack.c.l.b16 %v885
        %v926 = vunpack.c.l.b16 %v886
        %v927 = vunpack.c.l.b16 %v887
        %v928 = vunpack.c.l.b16 %v888
        %v929 = vunpack.c.l.b16 %v889
        %v930 = vunpack.c.l.b16 %v890
        %v931 = vpack.c.b16 %v916, %v915
        %v932 = vpack.c.b16 %v918, %v917
        %v933 = vpack.c.b16 %v920, %v919
        %v934 = vpack.c.b16 %v922, %v921
        %v935 = vpack.c.b16 %v924, %v923
        %v936 = vpack.c.b16 %v926, %v925
        %v937 = vpack.c.b16 %v928, %v927
        %v938 = vpack.c.b16 %v930, %v929
        %947 = vmatprep.subr.bf16.mxu0 0
        %948 = vmatpush1.bf16.msra.mxu0 %v931
        %949 = vmatprep.subr.bf16.mxu0 0
        %950 = vmatpush1.bf16.msra.mxu0 %v932
        %951 = vmatprep.subr.bf16.mxu0 0
        %952 = vmatpush1.bf16.msra.mxu0 %v933
        %953 = vmatprep.subr.bf16.mxu0 0
        %954 = vmatpush1.bf16.msra.mxu0 %v934
        %955 = vmatprep.subr.bf16.mxu0 0
        %956 = vmatpush1.bf16.msra.mxu0 %v935
        %957 = vmatprep.subr.bf16.mxu0 0
        %958 = vmatpush1.bf16.msra.mxu0 %v936
        %959 = vmatprep.subr.bf16.mxu0 0
        %960 = vmatpush1.bf16.msra.mxu0 %v937
        %961 = vmatprep.subr.bf16.mxu0 0
        %962 = vmatpush1.bf16.msra.mxu0 %v938
        %963 = vmatprep.subr.bf16.mxu0 0
        %964 = vmatpush1.bf16.msra.mxu0 0
        %965 = vmatprep.subr.bf16.mxu0 0
        %966 = vmatpush1.bf16.msra.mxu0 0
        %967 = vmatprep.subr.bf16.mxu0 0
        %968 = vmatpush1.bf16.msra.mxu0 0
        %969 = vmatprep.subr.bf16.mxu0 0
        %970 = vmatpush1.bf16.msra.mxu0 0
        %971 = vmatprep.subr.bf16.mxu0 0
        %972 = vmatpush1.bf16.msra.mxu0 0
        %973 = vmatprep.subr.bf16.mxu0 0
        %974 = vmatpush1.bf16.msra.mxu0 0
        %975 = vmatprep.subr.bf16.mxu0 0
        %976 = vmatpush1.bf16.msra.mxu0 0
        %977 = vmatprep.subr.bf16.mxu0 0
        %978 = vmatpush1.bf16.msra.mxu0 0
        %979 = vmatprep.mubr.bf16.mxu0 0
        %980 = vmatmul.mubr.bf16.gmra.mrb[0].mxu0 %v858
        %v981 = vpop.f32.mrb[0].mxu0
        %v982 = vadd.f32 %v897, %v981
        %v983 = vpop.f32.mrb[0].mxu0
        %v984 = vpop.f32.mrb[0].mxu0
        %v985 = vadd.f32 %v897, %v984
        %v986 = vpop.f32.mrb[0].mxu0
        %987 = vmatprep.mubr.bf16.mxu0 0
        %988 = vmatmul.mubr.bf16.gmra.mrb[0].mxu0 %v859
        %v989 = vpop.f32.mrb[0].mxu0
        %v990 = vadd.f32 %v897, %v989
        %v991 = vpop.f32.mrb[0].mxu0
        %v992 = vpop.f32.mrb[0].mxu0
        %v993 = vadd.f32 %v897, %v992
        %v994 = vpop.f32.mrb[0].mxu0
        %995 = vmatprep.mubr.bf16.mxu0 0
        %996 = vmatmul.mubr.bf16.gmra.mrb[0].mxu0 %v860
        %v997 = vpop.f32.mrb[0].mxu0
        %v998 = vadd.f32 %v897, %v997
        %v999 = vpop.f32.mrb[0].mxu0
        %v1000 = vpop.f32.mrb[0].mxu0
        %v1001 = vadd.f32 %v897, %v1000
        %v1002 = vpop.f32.mrb[0].mxu0
        %1003 = vmatprep.mubr.bf16.mxu0 0
        %1004 = vmatmul.mubr.bf16.gmra.mrb[0].mxu0 %v861
        %v1005 = vpop.f32.mrb[0].mxu0
        %v1006 = vadd.f32 %v897, %v1005
        %v1007 = vpop.f32.mrb[0].mxu0
        %v1008 = vpop.f32.mrb[0].mxu0
        %v1009 = vadd.f32 %v897, %v1008
        %v1010 = vpop.f32.mrb[0].mxu0
        %1011 = vmatprep.mubr.bf16.mxu0 0
        %1012 = vmatmul.mubr.bf16.gmra.mrb[0].mxu0 %v862
        %v1013 = vpop.f32.mrb[0].mxu0
        %v1014 = vadd.f32 %v897, %v1013
        %v1015 = vpop.f32.mrb[0].mxu0
        %v1016 = vpop.f32.mrb[0].mxu0
        %v1017 = vadd.f32 %v897, %v1016
        %v1018 = vpop.f32.mrb[0].mxu0
        %1019 = vmatprep.mubr.bf16.mxu0 0
        %1020 = vmatmul.mubr.bf16.gmra.mrb[0].mxu0 %v863
        %v1021 = vpop.f32.mrb[0].mxu0
        %v1022 = vadd.f32 %v897, %v1021
        %v1023 = vpop.f32.mrb[0].mxu0
        %v1024 = vpop.f32.mrb[0].mxu0
        %v1025 = vadd.f32 %v897, %v1024
        %v1026 = vpop.f32.mrb[0].mxu0
        %1027 = vmatprep.mubr.bf16.mxu0 0
        %1028 = vmatmul.mubr.bf16.gmra.mrb[0].mxu0 %v864
        %v1029 = vpop.f32.mrb[0].mxu0
        %v1030 = vadd.f32 %v897, %v1029
        %v1031 = vpop.f32.mrb[0].mxu0
        %v1032 = vpop.f32.mrb[0].mxu0
        %v1033 = vadd.f32 %v897, %v1032
        %v1034 = vpop.f32.mrb[0].mxu0
        %1035 = vmatprep.mubr.bf16.mxu0 0
        %1036 = vmatmul.mubr.bf16.gmra.mrb[0].mxu0 %v865
        %v1037 = vpop.f32.mrb[0].mxu0
        %v1038 = vadd.f32 %v897, %v1037
        %v1039 = vpop.f32.mrb[0].mxu0
        %v1040 = vpop.f32.mrb[0].mxu0
        %v1041 = vadd.f32 %v897, %v1040
        %v1042 = vpop.f32.mrb[0].mxu0
        %1043 = vmatprep.mubr.bf16.mxu0 0
        %1044 = vmatmul.mubr.bf16.gmra.mrb[0].mxu0 %v866
        %v1045 = vpop.f32.mrb[0].mxu0
        %v1046 = vadd.f32 %v897, %v1045
        %v1047 = vpop.f32.mrb[0].mxu0
        %v1048 = vpop.f32.mrb[0].mxu0
        %v1049 = vadd.f32 %v897, %v1048
        %v1050 = vpop.f32.mrb[0].mxu0
        %1051 = vmatprep.mubr.bf16.mxu0 0
        %1052 = vmatmul.mubr.bf16.gmra.mrb[0].mxu0 %v867
        %v1053 = vpop.f32.mrb[0].mxu0
        %v1054 = vadd.f32 %v897, %v1053
        %v1055 = vpop.f32.mrb[0].mxu0
        %v1056 = vpop.f32.mrb[0].mxu0
        %v1057 = vadd.f32 %v897, %v1056
        %v1058 = vpop.f32.mrb[0].mxu0
        %1059 = vmatprep.mubr.bf16.mxu0 0
        %1060 = vmatmul.mubr.bf16.gmra.mrb[0].mxu0 %v868
        %v1061 = vpop.f32.mrb[0].mxu0
        %v1062 = vadd.f32 %v897, %v1061
        %v1063 = vpop.f32.mrb[0].mxu0
        %v1064 = vpop.f32.mrb[0].mxu0
        %v1065 = vadd.f32 %v897, %v1064
        %v1066 = vpop.f32.mrb[0].mxu0
        %1067 = vmatprep.mubr.bf16.mxu0 0
        %1068 = vmatmul.mubr.bf16.gmra.mrb[0].mxu0 %v869
        %v1069 = vpop.f32.mrb[0].mxu0
        %v1070 = vadd.f32 %v897, %v1069
        %v1071 = vpop.f32.mrb[0].mxu0
        %v1072 = vpop.f32.mrb[0].mxu0
        %v1073 = vadd.f32 %v897, %v1072
        %v1074 = vpop.f32.mrb[0].mxu0
        %1075 = vmatprep.mubr.bf16.mxu0 0
        %1076 = vmatmul.mubr.bf16.gmra.mrb[0].mxu0 %v870
        %v1077 = vpop.f32.mrb[0].mxu0
        %v1078 = vadd.f32 %v897, %v1077
        %v1079 = vpop.f32.mrb[0].mxu0
        %v1080 = vpop.f32.mrb[0].mxu0
        %v1081 = vadd.f32 %v897, %v1080
        %v1082 = vpop.f32.mrb[0].mxu0
        %1083 = vmatprep.mubr.bf16.mxu0 0
        %1084 = vmatmul.mubr.bf16.gmra.mrb[0].mxu0 %v871
        %v1085 = vpop.f32.mrb[0].mxu0
        %v1086 = vadd.f32 %v897, %v1085
        %v1087 = vpop.f32.mrb[0].mxu0
        %v1088 = vpop.f32.mrb[0].mxu0
        %v1089 = vadd.f32 %v897, %v1088
        %v1090 = vpop.f32.mrb[0].mxu0
        %1091 = vmatprep.mubr.bf16.mxu0 0
        %1092 = vmatmul.mubr.bf16.gmra.mrb[0].mxu0 %v872
        %v1093 = vpop.f32.mrb[0].mxu0
        %v1094 = vadd.f32 %v897, %v1093
        %v1095 = vpop.f32.mrb[0].mxu0
        %v1096 = vpop.f32.mrb[0].mxu0
        %v1097 = vadd.f32 %v897, %v1096
        %v1098 = vpop.f32.mrb[0].mxu0
        %1099 = vmatprep.mubr.bf16.mxu0 0
        %1100 = vmatmul.mubr.bf16.gmra.mrb[0].mxu0 %v873
        %v1101 = vpop.f32.mrb[0].mxu0
        %v1102 = vadd.f32 %v897, %v1101
        %v1103 = vpop.f32.mrb[0].mxu0
        %v1104 = vpop.f32.mrb[0].mxu0
        %v1105 = vadd.f32 %v897, %v1104
        %v1106 = vpop.f32.mrb[0].mxu0
        %1107 = vdwg.mxu0
        %v1108 = vpack.c.bf16 %v985, %v982
        %v1109 = vpack.c.bf16 %v993, %v990
        %v1110 = vpack.c.bf16 %v1001, %v998
        %v1111 = vpack.c.bf16 %v1009, %v1006
        %v1112 = vpack.c.bf16 %v1017, %v1014
        %v1113 = vpack.c.bf16 %v1025, %v1022
        %v1114 = vpack.c.bf16 %v1033, %v1030
        %v1115 = vpack.c.bf16 %v1041, %v1038
        %v1116 = vpack.c.bf16 %v1049, %v1046
        %v1117 = vpack.c.bf16 %v1057, %v1054
        %v1118 = vpack.c.bf16 %v1065, %v1062
        %v1119 = vpack.c.bf16 %v1073, %v1070
        %v1120 = vpack.c.bf16 %v1081, %v1078
        %v1121 = vpack.c.bf16 %v1089, %v1086
        %v1122 = vpack.c.bf16 %v1097, %v1094
        %v1123 = vpack.c.bf16 %v1105, %v1102
        %s1124 = scalar_lea.vmem %s2, 128
        %v1125 = vld [vmem:[%s1124] sm:$0xf]
        %v1126 = vld [vmem:[%s1124 + $0x4] sm:$0xf]
        %v1127 = vld [vmem:[%s1124 + $0x8] sm:$0xf]
        %v1128 = vld [vmem:[%s1124 + $0xc] sm:$0xf]
        %v1129 = vld [vmem:[%s1124 + $0x10] sm:$0xf]
        %v1130 = vld [vmem:[%s1124 + $0x14] sm:$0xf]
        %v1131 = vld [vmem:[%s1124 + $0x18] sm:$0xf]
        %v1132 = vld [vmem:[%s1124 + $0x1c] sm:$0xf]
        %v1133 = vld [vmem:[%s1124 + $0x20] sm:$0xf]
        %v1134 = vld [vmem:[%s1124 + $0x24] sm:$0xf]
        %v1135 = vld [vmem:[%s1124 + $0x28] sm:$0xf]
        %v1136 = vld [vmem:[%s1124 + $0x2c] sm:$0xf]
        %v1137 = vld [vmem:[%s1124 + $0x30] sm:$0xf]
        %v1138 = vld [vmem:[%s1124 + $0x34] sm:$0xf]
        %v1139 = vld [vmem:[%s1124 + $0x38] sm:$0xf]
        %v1140 = vld [vmem:[%s1124 + $0x3c] sm:$0xf]
        %s1141 = scalar_lea.vmem %s3, 3
        %v1142 = vld [vmem:[%s1141] sm:$0x1]
        %v1144 = vlaneseq
        %v1145 = vshrl.u32 %v1144, 7
        %v1146 = vsub.s32 0, %v1145
        %v1147 = vrot.slane %v1142, %v1146
        %v1165 = vunpack.c.l.b16 %v1125
        %v1166 = vunpack.c.l.b16 %v1126
        %v1167 = vunpack.c.l.b16 %v1127
        %v1168 = vunpack.c.l.b16 %v1128
        %v1169 = vunpack.c.l.b16 %v1129
        %v1170 = vunpack.c.l.b16 %v1130
        %v1171 = vunpack.c.l.b16 %v1131
        %v1172 = vunpack.c.l.b16 %v1132
        %v1173 = vunpack.c.l.b16 %v1133
        %v1174 = vunpack.c.l.b16 %v1134
        %v1175 = vunpack.c.l.b16 %v1135
        %v1176 = vunpack.c.l.b16 %v1136
        %v1177 = vunpack.c.l.b16 %v1137
        %v1178 = vunpack.c.l.b16 %v1138
        %v1179 = vunpack.c.l.b16 %v1139
        %v1180 = vunpack.c.l.b16 %v1140
        %v1181 = vpack.c.b16 %v1166, %v1165
        %v1182 = vpack.c.b16 %v1168, %v1167
        %v1183 = vpack.c.b16 %v1170, %v1169
        %v1184 = vpack.c.b16 %v1172, %v1171
        %v1185 = vpack.c.b16 %v1174, %v1173
        %v1186 = vpack.c.b16 %v1176, %v1175
        %v1187 = vpack.c.b16 %v1178, %v1177
        %v1188 = vpack.c.b16 %v1180, %v1179
        %1197 = vmatprep.subr.bf16.mxu0 0
        %1198 = vmatpush1.bf16.msra.mxu0 %v1181
        %1199 = vmatprep.subr.bf16.mxu0 0
        %1200 = vmatpush1.bf16.msra.mxu0 %v1182
        %1201 = vmatprep.subr.bf16.mxu0 0
        %1202 = vmatpush1.bf16.msra.mxu0 %v1183
        %1203 = vmatprep.subr.bf16.mxu0 0
        %1204 = vmatpush1.bf16.msra.mxu0 %v1184
        %1205 = vmatprep.subr.bf16.mxu0 0
        %1206 = vmatpush1.bf16.msra.mxu0 %v1185
        %1207 = vmatprep.subr.bf16.mxu0 0
        %1208 = vmatpush1.bf16.msra.mxu0 %v1186
        %1209 = vmatprep.subr.bf16.mxu0 0
        %1210 = vmatpush1.bf16.msra.mxu0 %v1187
        %1211 = vmatprep.subr.bf16.mxu0 0
        %1212 = vmatpush1.bf16.msra.mxu0 %v1188
        %1213 = vmatprep.subr.bf16.mxu0 0
        %1214 = vmatpush1.bf16.msra.mxu0 0
        %1215 = vmatprep.subr.bf16.mxu0 0
        %1216 = vmatpush1.bf16.msra.mxu0 0
        %1217 = vmatprep.subr.bf16.mxu0 0
        %1218 = vmatpush1.bf16.msra.mxu0 0
        %1219 = vmatprep.subr.bf16.mxu0 0
        %1220 = vmatpush1.bf16.msra.mxu0 0
        %1221 = vmatprep.subr.bf16.mxu0 0
        %1222 = vmatpush1.bf16.msra.mxu0 0
        %1223 = vmatprep.subr.bf16.mxu0 0
        %1224 = vmatpush1.bf16.msra.mxu0 0
        %1225 = vmatprep.subr.bf16.mxu0 0
        %1226 = vmatpush1.bf16.msra.mxu0 0
        %1227 = vmatprep.subr.bf16.mxu0 0
        %1228 = vmatpush1.bf16.msra.mxu0 0
        %1229 = vmatprep.mubr.bf16.mxu0 0
        %1230 = vmatmul.mubr.bf16.gmra.mrb[0].mxu0 %v1108
        %v1231 = vpop.f32.mrb[0].mxu0
        %v1232 = vadd.f32 %v1147, %v1231
        %v1233 = vpop.f32.mrb[0].mxu0
        %v1234 = vpop.f32.mrb[0].mxu0
        %v1235 = vadd.f32 %v1147, %v1234
        %v1236 = vpop.f32.mrb[0].mxu0
        %1237 = vmatprep.mubr.bf16.mxu0 0
        %1238 = vmatmul.mubr.bf16.gmra.mrb[0].mxu0 %v1109
        %v1239 = vpop.f32.mrb[0].mxu0
        %v1240 = vadd.f32 %v1147, %v1239
        %v1241 = vpop.f32.mrb[0].mxu0
        %v1242 = vpop.f32.mrb[0].mxu0
        %v1243 = vadd.f32 %v1147, %v1242
        %v1244 = vpop.f32.mrb[0].mxu0
        %1245 = vmatprep.mubr.bf16.mxu0 0
        %1246 = vmatmul.mubr.bf16.gmra.mrb[0].mxu0 %v1110
        %v1247 = vpop.f32.mrb[0].mxu0
        %v1248 = vadd.f32 %v1147, %v1247
        %v1249 = vpop.f32.mrb[0].mxu0
        %v1250 = vpop.f32.mrb[0].mxu0
        %v1251 = vadd.f32 %v1147, %v1250
        %v1252 = vpop.f32.mrb[0].mxu0
        %1253 = vmatprep.mubr.bf16.mxu0 0
        %1254 = vmatmul.mubr.bf16.gmra.mrb[0].mxu0 %v1111
        %v1255 = vpop.f32.mrb[0].mxu0
        %v1256 = vadd.f32 %v1147, %v1255
        %v1257 = vpop.f32.mrb[0].mxu0
        %v1258 = vpop.f32.mrb[0].mxu0
        %v1259 = vadd.f32 %v1147, %v1258
        %v1260 = vpop.f32.mrb[0].mxu0
        %1261 = vmatprep.mubr.bf16.mxu0 0
        %1262 = vmatmul.mubr.bf16.gmra.mrb[0].mxu0 %v1112
        %v1263 = vpop.f32.mrb[0].mxu0
        %v1264 = vadd.f32 %v1147, %v1263
        %v1265 = vpop.f32.mrb[0].mxu0
        %v1266 = vpop.f32.mrb[0].mxu0
        %v1267 = vadd.f32 %v1147, %v1266
        %v1268 = vpop.f32.mrb[0].mxu0
        %1269 = vmatprep.mubr.bf16.mxu0 0
        %1270 = vmatmul.mubr.bf16.gmra.mrb[0].mxu0 %v1113
        %v1271 = vpop.f32.mrb[0].mxu0
        %v1272 = vadd.f32 %v1147, %v1271
        %v1273 = vpop.f32.mrb[0].mxu0
        %v1274 = vpop.f32.mrb[0].mxu0
        %v1275 = vadd.f32 %v1147, %v1274
        %v1276 = vpop.f32.mrb[0].mxu0
        %1277 = vmatprep.mubr.bf16.mxu0 0
        %1278 = vmatmul.mubr.bf16.gmra.mrb[0].mxu0 %v1114
        %v1279 = vpop.f32.mrb[0].mxu0
        %v1280 = vadd.f32 %v1147, %v1279
        %v1281 = vpop.f32.mrb[0].mxu0
        %v1282 = vpop.f32.mrb[0].mxu0
        %v1283 = vadd.f32 %v1147, %v1282
        %v1284 = vpop.f32.mrb[0].mxu0
        %1285 = vmatprep.mubr.bf16.mxu0 0
        %1286 = vmatmul.mubr.bf16.gmra.mrb[0].mxu0 %v1115
        %v1287 = vpop.f32.mrb[0].mxu0
        %v1288 = vadd.f32 %v1147, %v1287
        %v1289 = vpop.f32.mrb[0].mxu0
        %v1290 = vpop.f32.mrb[0].mxu0
        %v1291 = vadd.f32 %v1147, %v1290
        %v1292 = vpop.f32.mrb[0].mxu0
        %1293 = vmatprep.mubr.bf16.mxu0 0
        %1294 = vmatmul.mubr.bf16.gmra.mrb[0].mxu0 %v1116
        %v1295 = vpop.f32.mrb[0].mxu0
        %v1296 = vadd.f32 %v1147, %v1295
        %v1297 = vpop.f32.mrb[0].mxu0
        %v1298 = vpop.f32.mrb[0].mxu0
        %v1299 = vadd.f32 %v1147, %v1298
        %v1300 = vpop.f32.mrb[0].mxu0
        %1301 = vmatprep.mubr.bf16.mxu0 0
        %1302 = vmatmul.mubr.bf16.gmra.mrb[0].mxu0 %v1117
        %v1303 = vpop.f32.mrb[0].mxu0
        %v1304 = vadd.f32 %v1147, %v1303
        %v1305 = vpop.f32.mrb[0].mxu0
        %v1306 = vpop.f32.mrb[0].mxu0
        %v1307 = vadd.f32 %v1147, %v1306
        %v1308 = vpop.f32.mrb[0].mxu0
        %1309 = vmatprep.mubr.bf16.mxu0 0
        %1310 = vmatmul.mubr.bf16.gmra.mrb[0].mxu0 %v1118
        %v1311 = vpop.f32.mrb[0].mxu0
        %v1312 = vadd.f32 %v1147, %v1311
        %v1313 = vpop.f32.mrb[0].mxu0
        %v1314 = vpop.f32.mrb[0].mxu0
        %v1315 = vadd.f32 %v1147, %v1314
        %v1316 = vpop.f32.mrb[0].mxu0
        %1317 = vmatprep.mubr.bf16.mxu0 0
        %1318 = vmatmul.mubr.bf16.gmra.mrb[0].mxu0 %v1119
        %v1319 = vpop.f32.mrb[0].mxu0
        %v1320 = vadd.f32 %v1147, %v1319
        %v1321 = vpop.f32.mrb[0].mxu0
        %v1322 = vpop.f32.mrb[0].mxu0
        %v1323 = vadd.f32 %v1147, %v1322
        %v1324 = vpop.f32.mrb[0].mxu0
        %1325 = vmatprep.mubr.bf16.mxu0 0
        %1326 = vmatmul.mubr.bf16.gmra.mrb[0].mxu0 %v1120
        %v1327 = vpop.f32.mrb[0].mxu0
        %v1328 = vadd.f32 %v1147, %v1327
        %v1329 = vpop.f32.mrb[0].mxu0
        %v1330 = vpop.f32.mrb[0].mxu0
        %v1331 = vadd.f32 %v1147, %v1330
        %v1332 = vpop.f32.mrb[0].mxu0
        %1333 = vmatprep.mubr.bf16.mxu0 0
        %1334 = vmatmul.mubr.bf16.gmra.mrb[0].mxu0 %v1121
        %v1335 = vpop.f32.mrb[0].mxu0
        %v1336 = vadd.f32 %v1147, %v1335
        %v1337 = vpop.f32.mrb[0].mxu0
        %v1338 = vpop.f32.mrb[0].mxu0
        %v1339 = vadd.f32 %v1147, %v1338
        %v1340 = vpop.f32.mrb[0].mxu0
        %1341 = vmatprep.mubr.bf16.mxu0 0
        %1342 = vmatmul.mubr.bf16.gmra.mrb[0].mxu0 %v1122
        %v1343 = vpop.f32.mrb[0].mxu0
        %v1344 = vadd.f32 %v1147, %v1343
        %v1345 = vpop.f32.mrb[0].mxu0
        %v1346 = vpop.f32.mrb[0].mxu0
        %v1347 = vadd.f32 %v1147, %v1346
        %v1348 = vpop.f32.mrb[0].mxu0
        %1349 = vmatprep.mubr.bf16.mxu0 0
        %1350 = vmatmul.mubr.bf16.gmra.mrb[0].mxu0 %v1123
        %v1351 = vpop.f32.mrb[0].mxu0
        %v1352 = vadd.f32 %v1147, %v1351
        %v1353 = vpop.f32.mrb[0].mxu0
        %v1354 = vpop.f32.mrb[0].mxu0
        %v1355 = vadd.f32 %v1147, %v1354
        %v1356 = vpop.f32.mrb[0].mxu0
        %1357 = vdwg.mxu0
        %v1358 = vmax.f32 %v1232, 0.0
        %v1359 = vmax.f32 %v1235, 0.0
        %v1360 = vmax.f32 %v1240, 0.0
        %v1361 = vmax.f32 %v1243, 0.0
        %v1362 = vmax.f32 %v1248, 0.0
        %v1363 = vmax.f32 %v1251, 0.0
        %v1364 = vmax.f32 %v1256, 0.0
        %v1365 = vmax.f32 %v1259, 0.0
        %v1366 = vmax.f32 %v1264, 0.0
        %v1367 = vmax.f32 %v1267, 0.0
        %v1368 = vmax.f32 %v1272, 0.0
        %v1369 = vmax.f32 %v1275, 0.0
        %v1370 = vmax.f32 %v1280, 0.0
        %v1371 = vmax.f32 %v1283, 0.0
        %v1372 = vmax.f32 %v1288, 0.0
        %v1373 = vmax.f32 %v1291, 0.0
        %v1374 = vmax.f32 %v1296, 0.0
        %v1375 = vmax.f32 %v1299, 0.0
        %v1376 = vmax.f32 %v1304, 0.0
        %v1377 = vmax.f32 %v1307, 0.0
        %v1378 = vmax.f32 %v1312, 0.0
        %v1379 = vmax.f32 %v1315, 0.0
        %v1380 = vmax.f32 %v1320, 0.0
        %v1381 = vmax.f32 %v1323, 0.0
        %v1382 = vmax.f32 %v1328, 0.0
        %v1383 = vmax.f32 %v1331, 0.0
        %v1384 = vmax.f32 %v1336, 0.0
        %v1385 = vmax.f32 %v1339, 0.0
        %v1386 = vmax.f32 %v1344, 0.0
        %v1387 = vmax.f32 %v1347, 0.0
        %v1388 = vmax.f32 %v1352, 0.0
        %v1389 = vmax.f32 %v1355, 0.0
        %v1390 = vpack.c.bf16 %v1359, %v1358
        %v1391 = vpack.c.bf16 %v1361, %v1360
        %v1392 = vpack.c.bf16 %v1363, %v1362
        %v1393 = vpack.c.bf16 %v1365, %v1364
        %v1394 = vpack.c.bf16 %v1367, %v1366
        %v1395 = vpack.c.bf16 %v1369, %v1368
        %v1396 = vpack.c.bf16 %v1371, %v1370
        %v1397 = vpack.c.bf16 %v1373, %v1372
        %v1398 = vpack.c.bf16 %v1375, %v1374
        %v1399 = vpack.c.bf16 %v1377, %v1376
        %v1400 = vpack.c.bf16 %v1379, %v1378
        %v1401 = vpack.c.bf16 %v1381, %v1380
        %v1402 = vpack.c.bf16 %v1383, %v1382
        %v1403 = vpack.c.bf16 %v1385, %v1384
        %v1404 = vpack.c.bf16 %v1387, %v1386
        %v1405 = vpack.c.bf16 %v1389, %v1388
        %s1406 = scalar_lea.vmem %s2, 192
        %v1407 = vld [vmem:[%s1406] sm:$0xf]
        %v1408 = vld [vmem:[%s1406 + $0x4] sm:$0xf]
        %v1409 = vld [vmem:[%s1406 + $0x8] sm:$0xf]
        %v1410 = vld [vmem:[%s1406 + $0xc] sm:$0xf]
        %v1411 = vld [vmem:[%s1406 + $0x10] sm:$0xf]
        %v1412 = vld [vmem:[%s1406 + $0x14] sm:$0xf]
        %v1413 = vld [vmem:[%s1406 + $0x18] sm:$0xf]
        %v1414 = vld [vmem:[%s1406 + $0x1c] sm:$0xf]
        %v1415 = vld [vmem:[%s1406 + $0x20] sm:$0xf]
        %v1416 = vld [vmem:[%s1406 + $0x24] sm:$0xf]
        %v1417 = vld [vmem:[%s1406 + $0x28] sm:$0xf]
        %v1418 = vld [vmem:[%s1406 + $0x2c] sm:$0xf]
        %v1419 = vld [vmem:[%s1406 + $0x30] sm:$0xf]
        %v1420 = vld [vmem:[%s1406 + $0x34] sm:$0xf]
        %v1421 = vld [vmem:[%s1406 + $0x38] sm:$0xf]
        %v1422 = vld [vmem:[%s1406 + $0x3c] sm:$0xf]
        %s1423 = scalar_lea.vmem %s3, 4
        %v1424 = vld [vmem:[%s1423] sm:$0x1]
        %v1426 = vlaneseq
        %v1427 = vshrl.u32 %v1426, 7
        %v1428 = vsub.s32 0, %v1427
        %v1429 = vrot.slane %v1424, %v1428
        %v1447 = vunpack.c.l.b16 %v1407
        %v1448 = vunpack.c.l.b16 %v1408
        %v1449 = vunpack.c.l.b16 %v1409
        %v1450 = vunpack.c.l.b16 %v1410
        %v1451 = vunpack.c.l.b16 %v1411
        %v1452 = vunpack.c.l.b16 %v1412
        %v1453 = vunpack.c.l.b16 %v1413
        %v1454 = vunpack.c.l.b16 %v1414
        %v1455 = vunpack.c.l.b16 %v1415
        %v1456 = vunpack.c.l.b16 %v1416
        %v1457 = vunpack.c.l.b16 %v1417
        %v1458 = vunpack.c.l.b16 %v1418
        %v1459 = vunpack.c.l.b16 %v1419
        %v1460 = vunpack.c.l.b16 %v1420
        %v1461 = vunpack.c.l.b16 %v1421
        %v1462 = vunpack.c.l.b16 %v1422
        %v1463 = vpack.c.b16 %v1448, %v1447
        %v1464 = vpack.c.b16 %v1450, %v1449
        %v1465 = vpack.c.b16 %v1452, %v1451
        %v1466 = vpack.c.b16 %v1454, %v1453
        %v1467 = vpack.c.b16 %v1456, %v1455
        %v1468 = vpack.c.b16 %v1458, %v1457
        %v1469 = vpack.c.b16 %v1460, %v1459
        %v1470 = vpack.c.b16 %v1462, %v1461
        %1479 = vmatprep.subr.bf16.mxu0 0
        %1480 = vmatpush1.bf16.msra.mxu0 %v1463
        %1481 = vmatprep.subr.bf16.mxu0 0
        %1482 = vmatpush1.bf16.msra.mxu0 %v1464
        %1483 = vmatprep.subr.bf16.mxu0 0
        %1484 = vmatpush1.bf16.msra.mxu0 %v1465
        %1485 = vmatprep.subr.bf16.mxu0 0
        %1486 = vmatpush1.bf16.msra.mxu0 %v1466
        %1487 = vmatprep.subr.bf16.mxu0 0
        %1488 = vmatpush1.bf16.msra.mxu0 %v1467
        %1489 = vmatprep.subr.bf16.mxu0 0
        %1490 = vmatpush1.bf16.msra.mxu0 %v1468
        %1491 = vmatprep.subr.bf16.mxu0 0
        %1492 = vmatpush1.bf16.msra.mxu0 %v1469
        %1493 = vmatprep.subr.bf16.mxu0 0
        %1494 = vmatpush1.bf16.msra.mxu0 %v1470
        %1495 = vmatprep.subr.bf16.mxu0 0
        %1496 = vmatpush1.bf16.msra.mxu0 0
        %1497 = vmatprep.subr.bf16.mxu0 0
        %1498 = vmatpush1.bf16.msra.mxu0 0
        %1499 = vmatprep.subr.bf16.mxu0 0
        %1500 = vmatpush1.bf16.msra.mxu0 0
        %1501 = vmatprep.subr.bf16.mxu0 0
        %1502 = vmatpush1.bf16.msra.mxu0 0
        %1503 = vmatprep.subr.bf16.mxu0 0
        %1504 = vmatpush1.bf16.msra.mxu0 0
        %1505 = vmatprep.subr.bf16.mxu0 0
        %1506 = vmatpush1.bf16.msra.mxu0 0
        %1507 = vmatprep.subr.bf16.mxu0 0
        %1508 = vmatpush1.bf16.msra.mxu0 0
        %1509 = vmatprep.subr.bf16.mxu0 0
        %1510 = vmatpush1.bf16.msra.mxu0 0
        %1511 = vmatprep.mubr.bf16.mxu0 0
        %1512 = vmatmul.mubr.bf16.gmra.mrb[0].mxu0 %v1390
        %v1513 = vpop.f32.mrb[0].mxu0
        %v1514 = vadd.f32 %v1429, %v1513
        %v1515 = vpop.f32.mrb[0].mxu0
        %v1516 = vpop.f32.mrb[0].mxu0
        %v1517 = vadd.f32 %v1429, %v1516
        %v1518 = vpop.f32.mrb[0].mxu0
        %1519 = vmatprep.mubr.bf16.mxu0 0
        %1520 = vmatmul.mubr.bf16.gmra.mrb[0].mxu0 %v1391
        %v1521 = vpop.f32.mrb[0].mxu0
        %v1522 = vadd.f32 %v1429, %v1521
        %v1523 = vpop.f32.mrb[0].mxu0
        %v1524 = vpop.f32.mrb[0].mxu0
        %v1525 = vadd.f32 %v1429, %v1524
        %v1526 = vpop.f32.mrb[0].mxu0
        %1527 = vmatprep.mubr.bf16.mxu0 0
        %1528 = vmatmul.mubr.bf16.gmra.mrb[0].mxu0 %v1392
        %v1529 = vpop.f32.mrb[0].mxu0
        %v1530 = vadd.f32 %v1429, %v1529
        %v1531 = vpop.f32.mrb[0].mxu0
        %v1532 = vpop.f32.mrb[0].mxu0
        %v1533 = vadd.f32 %v1429, %v1532
        %v1534 = vpop.f32.mrb[0].mxu0
        %1535 = vmatprep.mubr.bf16.mxu0 0
        %1536 = vmatmul.mubr.bf16.gmra.mrb[0].mxu0 %v1393
        %v1537 = vpop.f32.mrb[0].mxu0
        %v1538 = vadd.f32 %v1429, %v1537
        %v1539 = vpop.f32.mrb[0].mxu0
        %v1540 = vpop.f32.mrb[0].mxu0
        %v1541 = vadd.f32 %v1429, %v1540
        %v1542 = vpop.f32.mrb[0].mxu0
        %1543 = vmatprep.mubr.bf16.mxu0 0
        %1544 = vmatmul.mubr.bf16.gmra.mrb[0].mxu0 %v1394
        %v1545 = vpop.f32.mrb[0].mxu0
        %v1546 = vadd.f32 %v1429, %v1545
        %v1547 = vpop.f32.mrb[0].mxu0
        %v1548 = vpop.f32.mrb[0].mxu0
        %v1549 = vadd.f32 %v1429, %v1548
        %v1550 = vpop.f32.mrb[0].mxu0
        %1551 = vmatprep.mubr.bf16.mxu0 0
        %1552 = vmatmul.mubr.bf16.gmra.mrb[0].mxu0 %v1395
        %v1553 = vpop.f32.mrb[0].mxu0
        %v1554 = vadd.f32 %v1429, %v1553
        %v1555 = vpop.f32.mrb[0].mxu0
        %v1556 = vpop.f32.mrb[0].mxu0
        %v1557 = vadd.f32 %v1429, %v1556
        %v1558 = vpop.f32.mrb[0].mxu0
        %1559 = vmatprep.mubr.bf16.mxu0 0
        %1560 = vmatmul.mubr.bf16.gmra.mrb[0].mxu0 %v1396
        %v1561 = vpop.f32.mrb[0].mxu0
        %v1562 = vadd.f32 %v1429, %v1561
        %v1563 = vpop.f32.mrb[0].mxu0
        %v1564 = vpop.f32.mrb[0].mxu0
        %v1565 = vadd.f32 %v1429, %v1564
        %v1566 = vpop.f32.mrb[0].mxu0
        %1567 = vmatprep.mubr.bf16.mxu0 0
        %1568 = vmatmul.mubr.bf16.gmra.mrb[0].mxu0 %v1397
        %v1569 = vpop.f32.mrb[0].mxu0
        %v1570 = vadd.f32 %v1429, %v1569
        %v1571 = vpop.f32.mrb[0].mxu0
        %v1572 = vpop.f32.mrb[0].mxu0
        %v1573 = vadd.f32 %v1429, %v1572
        %v1574 = vpop.f32.mrb[0].mxu0
        %1575 = vmatprep.mubr.bf16.mxu0 0
        %1576 = vmatmul.mubr.bf16.gmra.mrb[0].mxu0 %v1398
        %v1577 = vpop.f32.mrb[0].mxu0
        %v1578 = vadd.f32 %v1429, %v1577
        %v1579 = vpop.f32.mrb[0].mxu0
        %v1580 = vpop.f32.mrb[0].mxu0
        %v1581 = vadd.f32 %v1429, %v1580
        %v1582 = vpop.f32.mrb[0].mxu0
        %1583 = vmatprep.mubr.bf16.mxu0 0
        %1584 = vmatmul.mubr.bf16.gmra.mrb[0].mxu0 %v1399
        %v1585 = vpop.f32.mrb[0].mxu0
        %v1586 = vadd.f32 %v1429, %v1585
        %v1587 = vpop.f32.mrb[0].mxu0
        %v1588 = vpop.f32.mrb[0].mxu0
        %v1589 = vadd.f32 %v1429, %v1588
        %v1590 = vpop.f32.mrb[0].mxu0
        %1591 = vmatprep.mubr.bf16.mxu0 0
        %1592 = vmatmul.mubr.bf16.gmra.mrb[0].mxu0 %v1400
        %v1593 = vpop.f32.mrb[0].mxu0
        %v1594 = vadd.f32 %v1429, %v1593
        %v1595 = vpop.f32.mrb[0].mxu0
        %v1596 = vpop.f32.mrb[0].mxu0
        %v1597 = vadd.f32 %v1429, %v1596
        %v1598 = vpop.f32.mrb[0].mxu0
        %1599 = vmatprep.mubr.bf16.mxu0 0
        %1600 = vmatmul.mubr.bf16.gmra.mrb[0].mxu0 %v1401
        %v1601 = vpop.f32.mrb[0].mxu0
        %v1602 = vadd.f32 %v1429, %v1601
        %v1603 = vpop.f32.mrb[0].mxu0
        %v1604 = vpop.f32.mrb[0].mxu0
        %v1605 = vadd.f32 %v1429, %v1604
        %v1606 = vpop.f32.mrb[0].mxu0
        %1607 = vmatprep.mubr.bf16.mxu0 0
        %1608 = vmatmul.mubr.bf16.gmra.mrb[0].mxu0 %v1402
        %v1609 = vpop.f32.mrb[0].mxu0
        %v1610 = vadd.f32 %v1429, %v1609
        %v1611 = vpop.f32.mrb[0].mxu0
        %v1612 = vpop.f32.mrb[0].mxu0
        %v1613 = vadd.f32 %v1429, %v1612
        %v1614 = vpop.f32.mrb[0].mxu0
        %1615 = vmatprep.mubr.bf16.mxu0 0
        %1616 = vmatmul.mubr.bf16.gmra.mrb[0].mxu0 %v1403
        %v1617 = vpop.f32.mrb[0].mxu0
        %v1618 = vadd.f32 %v1429, %v1617
        %v1619 = vpop.f32.mrb[0].mxu0
        %v1620 = vpop.f32.mrb[0].mxu0
        %v1621 = vadd.f32 %v1429, %v1620
        %v1622 = vpop.f32.mrb[0].mxu0
        %1623 = vmatprep.mubr.bf16.mxu0 0
        %1624 = vmatmul.mubr.bf16.gmra.mrb[0].mxu0 %v1404
        %v1625 = vpop.f32.mrb[0].mxu0
        %v1626 = vadd.f32 %v1429, %v1625
        %v1627 = vpop.f32.mrb[0].mxu0
        %v1628 = vpop.f32.mrb[0].mxu0
        %v1629 = vadd.f32 %v1429, %v1628
        %v1630 = vpop.f32.mrb[0].mxu0
        %1631 = vmatprep.mubr.bf16.mxu0 0
        %1632 = vmatmul.mubr.bf16.gmra.mrb[0].mxu0 %v1405
        %v1633 = vpop.f32.mrb[0].mxu0
        %v1634 = vadd.f32 %v1429, %v1633
        %v1635 = vpop.f32.mrb[0].mxu0
        %v1636 = vpop.f32.mrb[0].mxu0
        %v1637 = vadd.f32 %v1429, %v1636
        %v1638 = vpop.f32.mrb[0].mxu0
        %1639 = vdwg.mxu0
        %v1640 = vpack.c.bf16 %v1517, %v1514
        %v1641 = vpack.c.bf16 %v1525, %v1522
        %v1642 = vpack.c.bf16 %v1533, %v1530
        %v1643 = vpack.c.bf16 %v1541, %v1538
        %v1644 = vpack.c.bf16 %v1549, %v1546
        %v1645 = vpack.c.bf16 %v1557, %v1554
        %v1646 = vpack.c.bf16 %v1565, %v1562
        %v1647 = vpack.c.bf16 %v1573, %v1570
        %v1648 = vpack.c.bf16 %v1581, %v1578
        %v1649 = vpack.c.bf16 %v1589, %v1586
        %v1650 = vpack.c.bf16 %v1597, %v1594
        %v1651 = vpack.c.bf16 %v1605, %v1602
        %v1652 = vpack.c.bf16 %v1613, %v1610
        %v1653 = vpack.c.bf16 %v1621, %v1618
        %v1654 = vpack.c.bf16 %v1629, %v1626
        %v1655 = vpack.c.bf16 %v1637, %v1634
        %v1672 = vunpack.c.l.b16 %v1640
        %v1673 = vunpack.c.h.b16 %v1640
        %v1674 = vunpack.c.l.b16 %v1641
        %v1675 = vunpack.c.h.b16 %v1641
        %v1676 = vunpack.c.l.b16 %v1642
        %v1677 = vunpack.c.h.b16 %v1642
        %v1678 = vunpack.c.l.b16 %v1643
        %v1679 = vunpack.c.h.b16 %v1643
        %v1680 = vunpack.c.l.b16 %v1644
        %v1681 = vunpack.c.h.b16 %v1644
        %v1682 = vunpack.c.l.b16 %v1645
        %v1683 = vunpack.c.h.b16 %v1645
        %v1684 = vunpack.c.l.b16 %v1646
        %v1685 = vunpack.c.h.b16 %v1646
        %v1686 = vunpack.c.l.b16 %v1647
        %v1687 = vunpack.c.h.b16 %v1647
        %v1688 = vunpack.c.l.b16 %v1648
        %v1689 = vunpack.c.h.b16 %v1648
        %v1690 = vunpack.c.l.b16 %v1649
        %v1691 = vunpack.c.h.b16 %v1649
        %v1692 = vunpack.c.l.b16 %v1650
        %v1693 = vunpack.c.h.b16 %v1650
        %v1694 = vunpack.c.l.b16 %v1651
        %v1695 = vunpack.c.h.b16 %v1651
        %v1696 = vunpack.c.l.b16 %v1652
        %v1697 = vunpack.c.h.b16 %v1652
        %v1698 = vunpack.c.l.b16 %v1653
        %v1699 = vunpack.c.h.b16 %v1653
        %v1700 = vunpack.c.l.b16 %v1654
        %v1701 = vunpack.c.h.b16 %v1654
        %v1702 = vunpack.c.l.b16 %v1655
        %v1703 = vunpack.c.h.b16 %v1655
        %v1704 = vpack.c.b16 %v1672, %v1672
        %v1705 = vpack.c.b16 %v1673, %v1673
        %v1706 = vpack.c.b16 %v1674, %v1674
        %v1707 = vpack.c.b16 %v1675, %v1675
        %v1708 = vpack.c.b16 %v1676, %v1676
        %v1709 = vpack.c.b16 %v1677, %v1677
        %v1710 = vpack.c.b16 %v1678, %v1678
        %v1711 = vpack.c.b16 %v1679, %v1679
        %v1712 = vpack.c.b16 %v1680, %v1680
        %v1713 = vpack.c.b16 %v1681, %v1681
        %v1714 = vpack.c.b16 %v1682, %v1682
        %v1715 = vpack.c.b16 %v1683, %v1683
        %v1716 = vpack.c.b16 %v1684, %v1684
        %v1717 = vpack.c.b16 %v1685, %v1685
        %v1718 = vpack.c.b16 %v1686, %v1686
        %v1719 = vpack.c.b16 %v1687, %v1687
        %v1720 = vpack.c.b16 %v1688, %v1688
        %v1721 = vpack.c.b16 %v1689, %v1689
        %v1722 = vpack.c.b16 %v1690, %v1690
        %v1723 = vpack.c.b16 %v1691, %v1691
        %v1724 = vpack.c.b16 %v1692, %v1692
        %v1725 = vpack.c.b16 %v1693, %v1693
        %v1726 = vpack.c.b16 %v1694, %v1694
        %v1727 = vpack.c.b16 %v1695, %v1695
        %v1728 = vpack.c.b16 %v1696, %v1696
        %v1729 = vpack.c.b16 %v1697, %v1697
        %v1730 = vpack.c.b16 %v1698, %v1698
        %v1731 = vpack.c.b16 %v1699, %v1699
        %v1732 = vpack.c.b16 %v1700, %v1700
        %v1733 = vpack.c.b16 %v1701, %v1701
        %v1734 = vpack.c.b16 %v1702, %v1702
        %v1735 = vpack.c.b16 %v1703, %v1703
        %1768 = vst [vmem:[%s191] sm:$0xf] %v1704
        %1769 = vst [vmem:[%s191 + $0x4] sm:$0xf] %v1705
        %1770 = vst [vmem:[%s191 + $0x8] sm:$0xf] %v1706
        %1771 = vst [vmem:[%s191 + $0xc] sm:$0xf] %v1707
        %1772 = vst [vmem:[%s191 + $0x10] sm:$0xf] %v1708
        %1773 = vst [vmem:[%s191 + $0x14] sm:$0xf] %v1709
        %1774 = vst [vmem:[%s191 + $0x18] sm:$0xf] %v1710
        %1775 = vst [vmem:[%s191 + $0x1c] sm:$0xf] %v1711
        %1776 = vst [vmem:[%s191 + $0x20] sm:$0xf] %v1712
        %1777 = vst [vmem:[%s191 + $0x24] sm:$0xf] %v1713
        %1778 = vst [vmem:[%s191 + $0x28] sm:$0xf] %v1714
        %1779 = vst [vmem:[%s191 + $0x2c] sm:$0xf] %v1715
        %1780 = vst [vmem:[%s191 + $0x30] sm:$0xf] %v1716
        %1781 = vst [vmem:[%s191 + $0x34] sm:$0xf] %v1717
        %1782 = vst [vmem:[%s191 + $0x38] sm:$0xf] %v1718
        %1783 = vst [vmem:[%s191 + $0x3c] sm:$0xf] %v1719
        %1784 = vst [vmem:[%s191 + $0x40] sm:$0xf] %v1720
        %1785 = vst [vmem:[%s191 + $0x44] sm:$0xf] %v1721
        %1786 = vst [vmem:[%s191 + $0x48] sm:$0xf] %v1722
        %1787 = vst [vmem:[%s191 + $0x4c] sm:$0xf] %v1723
        %1788 = vst [vmem:[%s191 + $0x50] sm:$0xf] %v1724
        %1789 = vst [vmem:[%s191 + $0x54] sm:$0xf] %v1725
        %1790 = vst [vmem:[%s191 + $0x58] sm:$0xf] %v1726
        %1791 = vst [vmem:[%s191 + $0x5c] sm:$0xf] %v1727
        %1792 = vst [vmem:[%s191 + $0x60] sm:$0xf] %v1728
        %1793 = vst [vmem:[%s191 + $0x64] sm:$0xf] %v1729
        %1794 = vst [vmem:[%s191 + $0x68] sm:$0xf] %v1730
        %1795 = vst [vmem:[%s191 + $0x6c] sm:$0xf] %v1731
        %1796 = vst [vmem:[%s191 + $0x70] sm:$0xf] %v1732
        %1797 = vst [vmem:[%s191 + $0x74] sm:$0xf] %v1733
        %1798 = vst [vmem:[%s191 + $0x78] sm:$0xf] %v1734
        %1799 = vst [vmem:[%s191 + $0x7c] sm:$0xf] %v1735
        %s1800 = sand.u32 %s115, 1
        %s1801 = scalar_lea.sflag [#allocation3], %s1800
        %s1802 = sand.u32 %s115, 1
        %s1803 = smul.addr %s1802, 128
        %s1804 = scalar_lea.vmem [#allocation2], %s1803
        // Predicated region
        $region37: #{tpu_custom_call.1} parent=35 // pred_check
          %p1805 = pneg %p125
        $region38: #{tpu_custom_call.1} parent=35 // pred_check_branch
          %1807 = sbr.rel (%p1805) target = $region40
        $region39: #{tpu_custom_call.1} parent=35 // pred_region
          %s1808 = smul.u32 32, %s18
          %s1810 = ssub.s32 2048, 2048
          %1811 = vsyncadd %s1801, %s1810
          %s1812 = smul.addr %s1808, 64
          %s1813 = scalar_lea.hbm %s4, %s1812
          %s1814 = sshll.u32 %s1804, 4
          %s1815 = int_to_ptr.vmem [resolvable:$true] %s1814
          %1820 = dma.vmem_to_hbm [thread:$0]  %s1815, 2048, %s1813, %s1801, 64, 64, 4
        $region40: #{tpu_custom_call.1} parent=35 // pred_fallthru
          _
      $region36: #{tpu_custom_call.1} parent=5 // pred_fallthru
        _
      %p1821 = scmp.le.s32.totalorder 2, %s13
      // Predicated region
      $region41: #{tpu_custom_call.1} parent=5 // pred_check
        %p1822 = pneg %p1821
      $region42: #{tpu_custom_call.1} parent=5 // pred_check_branch
        %1824 = sbr.rel (%p1822) target = $region44
      $region43: #{tpu_custom_call.1} parent=5 // pred_region
        %s1825 = ssub.s32 %s13, 2
        // Predicated region
        $region45: #{tpu_custom_call.1} parent=43 // pred_check
          %p1826 = pneg %p131
        $region46: #{tpu_custom_call.1} parent=43 // pred_check_branch
          %1828 = sbr.rel (%p1826) target = $region48
        $region47: #{tpu_custom_call.1} parent=43 // pred_region
          %s1829 = sand.u32 %s116, 1
          %s1830 = scalar_lea.sflag [#allocation3], %s1829
          %s1831 = sand.u32 %s116, 1
          %s1832 = smul.addr %s1831, 128
          %s1833 = scalar_lea.vmem [#allocation2], %s1832
          %1834 = dma.done %s1830, 2048
        $region48: #{tpu_custom_call.1} parent=43 // pred_fallthru
          _
      $region44: #{tpu_custom_call.1} parent=5 // pred_fallthru
        _
    $region6: #{tpu_custom_call.1} parent=1 // loop_footer
      %s17 = sadd.s32 1, %s13
    $region7: #{tpu_custom_call.1} parent=1 // loop_footer_branch
      %12 = sbr.rel target = $region3
    $region8: #{tpu_custom_call.1} parent=1 // loop_exit
      _
    %1835 = vsyncpa [#allocation3], 1
    %s1836 = scalar_lea.sflag [#allocation3], 1
    %1837 = vsyncpa %s1836, 1

</llo_original>
